<compile_context>
chip_gen: v6e
topology: v6e:2x2x1
jax: 0.10.0
libtpu: 0.0.40
codegen_flags: <defaults>
</compile_context>

<pallas_src>
import functools

import jax
import jax.numpy as jnp
from jax.experimental import pallas as pl
from jax.experimental.pallas import tpu as pltpu


HP = 128   # hidden feature dim padded to one 128-lane tile
OP = 128   # output feature dim padded to one 128-lane tile


# ----------------------------------------------------------------------------
# Kernel: one grid step == one chunk of Tc timesteps. Weights resident,
# hidden carried in the (resident) hid_ref output block.
# ----------------------------------------------------------------------------
def rnn_chunk_kernel(pre_ref, h0_ref, w_h_ref, w_oo_ref, b_o_ref,
                     out_ref, hid_ref, *, tc, hp):
    c = pl.program_id(0)

    @pl.when(c == 0)
    def _seed():
        # Seed the carried hidden state from the initial hidden input.
        hid_ref[...] = h0_ref[...]

    bp = pre_ref.shape[1]        # padded batch (sublanes)
    op = out_ref.shape[2]        # padded output lanes

    # Load/broadcast loop-invariant operands once per chunk (hoisted; JAX does
    # not CSE broadcast_in_dim inside the unrolled loop).
    w_h = w_h_ref[...]                                        # (hp, hp+op)
    w_oo = w_oo_ref[...]                                      # (hp+op, op)
    b_o = jnp.broadcast_to(b_o_ref[...], (bp, op))            # mask baked in

    def step(s, h):
        # pre_s already holds [cat|x_t] @ [W_i2h.T | W_i2o.T] + biases.
        pre_s = pre_ref[s]                                    # (Bp, hp+op)

        # Recurrence term: single MXU push. combined = [hidden' | out_mid].
        combined = pre_s + jnp.dot(h, w_h, preferred_element_type=jnp.float32)

        h_new = combined[:, :hp]                              # padded lanes stay 0

        # Fused o2o: combined's lane layout matches the padded o2o weight rows,
        # so one K=256 contraction replaces the two separate dots.
        logits = (jnp.dot(combined, w_oo, preferred_element_type=jnp.float32)
                  + b_o)                                      # padded lanes ~ -1e30

        # Dropout(p=0.1): eval-mode forward semantics -> identity.
        # TODO(synk): training-mode dropout (random mask + 1/(1-p) scale) not emitted.

        # Numerically stable log-softmax over dim=1 (padded lanes already
        # pushed to -1e30 via the bias, so they cannot shift the normalizer).
        m = jnp.max(logits, axis=1, keepdims=True)
        shifted = logits - m
        lse = jnp.log(jnp.sum(jnp.exp(shifted), axis=1, keepdims=True))

        out_ref[s] = (shifted - lse).astype(out_ref.dtype)
        return h_new

    h_final = jax.lax.fori_loop(0, tc, step, hid_ref[...], unroll=True)
    hid_ref[...] = h_final


# ----------------------------------------------------------------------------
# One-time parameter preparation: transpose, split, fuse and zero-pad weights.
# ----------------------------------------------------------------------------
def prepare_params(params, n_categories, input_size, hidden_size, output_size,
                   hp=HP, op=OP):
    C, I, H, O = n_categories, input_size, hidden_size, output_size
    CI = C + I
    D = C + I + H

    w_i2h_t = params["w_i2h"].T                               # (D, H)
    w_i2o_t = params["w_i2o"].T                               # (D, O)

    # Fused, padded i2h|i2o weight: columns [0:H]->hidden', [hp:hp+O]->out_mid.
    w_comb = jnp.zeros((D, hp + op), jnp.float32)
    w_comb = w_comb.at[:, :H].set(w_i2h_t)
    w_comb = w_comb.at[:, hp:hp + O].set(w_i2o_t)
    w_ci = w_comb[:CI, :]                                     # (CI, hp+op) — used outside kernel
    w_h = jnp.zeros((hp, hp + op), jnp.float32).at[:H, :].set(w_comb[CI:, :])

    b_io = jnp.zeros((1, hp + op), jnp.float32)
    b_io = b_io.at[0, :H].set(params["b_i2h"])
    b_io = b_io.at[0, hp:hp + O].set(params["b_i2o"])

    # Fused o2o weight laid out to match `combined`'s [hidden' | out_mid] lanes.
    w_o2o_t = params["w_o2o"].T                               # (H+O, O)
    w_o2o_pad = jnp.zeros((hp + op, op), jnp.float32)
    w_o2o_pad = w_o2o_pad.at[:H, :O].set(w_o2o_t[:H, :])
    w_o2o_pad = w_o2o_pad.at[hp:hp + O, :O].set(w_o2o_t[H:, :])

    # Padded-lane mask baked into the bias (large finite negative, not -inf,
    # to avoid inf-inf -> NaN in the shifted logits).
    b_o = jnp.full((1, op), -1e30, jnp.float32).at[0, :O].set(params["b_o2o"])

    return {"w_ci": w_ci, "b_io": b_io, "w_h": w_h,
            "w_o2o_pad": w_o2o_pad, "b_o": b_o,
            "dims": (C, I, H, O, hp, op)}


def _pick_chunk(t, max_chunk=16):
    """Largest divisor of t that is <= max_chunk (so no remainder handling).

    max_chunk=16 keeps the per-chunk streamed blocks (~(Tc*Bp*384)*4 bytes,
    double-buffered) far below even v7x's 64 MiB VMEM while amortizing the
    fixed per-grid-step overhead over Tc timesteps.
    """
    for d in range(min(t, max_chunk), 0, -1):
        if t % d == 0:
            return d
    return 1


# ----------------------------------------------------------------------------
# Fused multi-timestep forward: one pallas_call for the whole sequence.
#   category:   (B, C)       constant over the sequence
#   inputs_seq: (T, B, I)    per-step inputs
#   hidden0:    (B, H)       initial hidden
# Returns (log_probs (T, B, O), hidden_final (B, H)).
# ----------------------------------------------------------------------------
def rnn_forward_seq(category, inputs_seq, hidden0, prep):
    C, I, H, O, hp, op = prep["dims"]
    T, B, _ = inputs_seq.shape
    CI = C + I
    Bp = max(8, ((B + 7) // 8) * 8)
    Tc = _pick_chunk(T)
    n_chunks = T // Tc

    # Phase 1 (outside the recurrence, one batched matmul over all timesteps):
    # pre[t] = [category | input_t] @ W_ci + b_io. The hidden-independent part
    # of both i2h and i2o, computed at full MXU row utilization (M = T*B).
    cat_seq = jnp.broadcast_to(category[None], (T, B, C))
    x_ci = jnp.concatenate([cat_seq, inputs_seq], axis=2).reshape(T * B, CI)
    pre = (x_ci @ prep["w_ci"] + prep["b_io"]).reshape(T, B, hp + op)
    pre = jnp.pad(pre, ((0, 0), (0, Bp - B), (0, 0)))          # (T, Bp, hp+op)

    h0 = jnp.zeros((Bp, hp), jnp.float32).at[:B, :H].set(hidden0)

    kernel = functools.partial(rnn_chunk_kernel, tc=Tc, hp=hp)

    # Advisory cost estimate so XLA can schedule surrounding ops.
    flops_per_step = 2 * Bp * (hp * (hp + op) + (hp + op) * op)
    weight_bytes = 4 * (hp * (hp + op) + (hp + op) * op + op)
    io_bytes = 4 * (T * Bp * (hp + op) + T * Bp * op + 2 * Bp * hp)
    cost = pl.CostEstimate(flops=T * flops_per_step,
                           transcendentals=T * Bp * (op + 1),
                           bytes_accessed=weight_bytes + io_bytes)

    out_padded, hid_padded = pl.pallas_call(
        kernel,
        out_shape=(jax.ShapeDtypeStruct((T, Bp, op), jnp.float32),
                   jax.ShapeDtypeStruct((Bp, hp), jnp.float32)),
        grid=(n_chunks,),
        in_specs=[
            # Streamed per-chunk precomputed-projection block.
            pl.BlockSpec((Tc, Bp, hp + op), lambda c: (c, 0, 0)),
            # Everything below is resident in VMEM for the whole sequence.
            pl.BlockSpec((Bp, hp), lambda c: (0, 0)),              # hidden0 seed
            pl.BlockSpec((hp, hp + op), lambda c: (0, 0)),         # w_h (recurrence)
            pl.BlockSpec((hp + op, op), lambda c: (0, 0)),         # fused o2o weight
            pl.BlockSpec((1, op), lambda c: (0, 0)),               # b_o2o (+ lane mask)
        ],
        out_specs=[
            pl.BlockSpec((Tc, Bp, op), lambda c: (c, 0, 0)),       # per-step log-probs
            pl.BlockSpec((Bp, hp), lambda c: (0, 0)),              # carried hidden
        ],
        compiler_params=pltpu.CompilerParams(
            dimension_semantics=("arbitrary",)),                   # time is sequential
        cost_estimate=cost,
    )(pre, h0, prep["w_h"], prep["w_o2o_pad"], prep["b_o"])

    # Drop batch/lane padding (one-time slice outside the kernel).
    return out_padded[:, :B, :O], hid_padded[:B, :H]


def rnn_forward(category, inp, hidden, prep):
    """Single-step forward matching the PyTorch module signature."""
    log_probs, hidden_new = rnn_forward_seq(category, inp[None], hidden, prep)
    return log_probs[0], hidden_new


# ----------------------------------------------------------------------------
# Parameter init (PyTorch nn.Linear default: U(-1/sqrt(fan_in), 1/sqrt(fan_in)))
# ----------------------------------------------------------------------------
def init_params(key, n_categories, input_size, hidden_size, output_size):
    D = n_categories + input_size + hidden_size
    HO = hidden_size + output_size
    keys = jax.random.split(key, 6)

    def lin(kw, kb, out_f, in_f):
        bound = 1.0 / jnp.sqrt(in_f)
        w = jax.random.uniform(kw, (out_f, in_f), jnp.float32, -bound, bound)
        b = jax.random.uniform(kb, (out_f,), jnp.float32, -bound, bound)
        return w, b

    w_i2h, b_i2h = lin(keys[0], keys[1], hidden_size, D)
    w_i2o, b_i2o = lin(keys[2], keys[3], output_size, D)
    w_o2o, b_o2o = lin(keys[4], keys[5], output_size, HO)
    return {"w_i2h": w_i2h, "b_i2h": b_i2h,
            "w_i2o": w_i2o, "b_i2o": b_i2o,
            "w_o2o": w_o2o, "b_o2o": b_o2o}


# ----------------------------------------------------------------------------
# Pure-JAX references.
# ----------------------------------------------------------------------------
def rnn_forward_ref(category, inp, hidden, params):
    x = jnp.concatenate([category, inp, hidden], axis=1)
    h = x @ params["w_i2h"].T + params["b_i2h"]
    o = x @ params["w_i2o"].T + params["b_i2o"]
    o2 = jnp.concatenate([h, o], axis=1) @ params["w_o2o"].T + params["b_o2o"]
    return jax.nn.log_softmax(o2, axis=1), h


def rnn_seq_ref(category, inputs_seq, hidden0, params):
    def step(h, x_t):
        lp, h_new = rnn_forward_ref(category, x_t, h, params)
        return h_new, lp
    h_final, lps = jax.lax.scan(step, hidden0, inputs_seq)
    return lps, h_final


if __name__ == "__main__":
    # Small, module-consistent shapes.
    B = 2                    # batch
    T = 8                    # sequence length (fused into one kernel chunk)
    n_categories = 8
    input_size = 16
    hidden_size = 32
    output_size = 16

    key = jax.random.PRNGKey(0)
    k_cat, k_in, k_par = jax.random.split(key, 3)

    category = jax.nn.one_hot(
        jax.random.randint(k_cat, (B,), 0, n_categories), n_categories
    ).astype(jnp.float32)                                            # (B, C)
    inputs_seq = jax.random.normal(k_in, (T, B, input_size), jnp.float32)  # (T, B, I)
    hidden0 = jnp.zeros((B, hidden_size), jnp.float32)               # init_hidden()

    params = init_params(k_par, n_categories, input_size, hidden_size, output_size)
    prep = prepare_params(params, n_categories, input_size, hidden_size, output_size)

    # Fused multi-timestep run: one pallas_call for the whole sequence.
    log_probs_seq, hidden_final = rnn_forward_seq(category, inputs_seq, hidden0, prep)
    jax.block_until_ready((log_probs_seq, hidden_final))

    ref_lp_seq, ref_h_final = rnn_seq_ref(category, inputs_seq, hidden0, params)
    assert jnp.allclose(log_probs_seq, ref_lp_seq, atol=1e-4), "seq log_softmax mismatch"
    assert jnp.allclose(hidden_final, ref_h_final, atol=1e-4), "seq hidden mismatch"

    # Single-step parity with the PyTorch module's forward().
    lp1, h1 = rnn_forward(category, inputs_seq[0], hidden0, prep)
    jax.block_until_ready((lp1, h1))
    ref_lp1, ref_h1 = rnn_forward_ref(category, inputs_seq[0], hidden0, params)
    assert jnp.allclose(lp1, ref_lp1, atol=1e-5), "step log_softmax mismatch"
    assert jnp.allclose(h1, ref_h1, atol=1e-5), "step hidden mismatch"

    print("KERNEL_OK")
</pallas_src>

<mosaic_0001>
module attributes {stable_mosaic.version = 11 : i64} {
  func.func @rnn_chunk_kernel(%arg0: i32, %arg1: memref<8x8x256xf32, #tpu.memory_space<vmem>>, %arg2: memref<8x128xf32, #tpu.memory_space<vmem>>, %arg3: memref<128x256xf32, #tpu.memory_space<vmem>>, %arg4: memref<256x128xf32, #tpu.memory_space<vmem>>, %arg5: memref<1x128xf32, #tpu.memory_space<vmem>>, %arg6: memref<8x8x128xf32, #tpu.memory_space<vmem>>, %arg7: memref<8x128xf32, #tpu.memory_space<vmem>>) attributes {dimension_semantics = [#tpu.dimension_semantics<arbitrary>], iteration_bounds = array<i64: 1>, scalar_prefetch = 0 : i64, scratch_operands = 0 : i64, tpu.core_type = #tpu.core_type<tc>, window_params = [{transform_indices = @transform_0, window_bounds = array<i64: 8, 8, 256>}, {pipeline_mode = #tpu.pipeline_mode<synchronous>, transform_indices = @transform_1, window_bounds = array<i64: 8, 128>}, {pipeline_mode = #tpu.pipeline_mode<synchronous>, transform_indices = @transform_2, window_bounds = array<i64: 128, 256>}, {pipeline_mode = #tpu.pipeline_mode<synchronous>, transform_indices = @transform_3, window_bounds = array<i64: 256, 128>}, {pipeline_mode = #tpu.pipeline_mode<synchronous>, transform_indices = @transform_4, window_bounds = array<i64: 1, 128>}, {transform_indices = @transform_5, window_bounds = array<i64: 8, 8, 128>}, {pipeline_mode = #tpu.pipeline_mode<synchronous>, transform_indices = @transform_6, window_bounds = array<i64: 8, 128>}]} {
    %c0_i32 = arith.constant 0 : i32
    %0 = arith.cmpi eq, %arg0, %c0_i32 : i32
    %1 = arith.extui %0 : i1 to i32
    %c0_i32_0 = arith.constant 0 : i32
    %2 = arith.cmpi ne, %1, %c0_i32_0 : i32
    scf.if %2 {
      %c0_74 = arith.constant 0 : index
      %c0_75 = arith.constant 0 : index
      %186 = vector.load %arg2[%c0_74, %c0_75] : memref<8x128xf32, #tpu.memory_space<vmem>>, vector<8x128xf32>
      %c0_76 = arith.constant 0 : index
      %c0_77 = arith.constant 0 : index
      %187 = vector.load %arg7[%c0_76, %c0_77] : memref<8x128xf32, #tpu.memory_space<vmem>>, vector<8x128xf32>
      tpu.vector_store %arg7[%c0_76, %c0_77], %186 {strides = array<i32>} : memref<8x128xf32, #tpu.memory_space<vmem>>, vector<8x128xf32>,
    } else {
    }
    %c0 = arith.constant 0 : index
    %c0_1 = arith.constant 0 : index
    %3 = vector.load %arg3[%c0, %c0_1] : memref<128x256xf32, #tpu.memory_space<vmem>>, vector<128x256xf32>
    %c0_2 = arith.constant 0 : index
    %c0_3 = arith.constant 0 : index
    %4 = vector.load %arg4[%c0_2, %c0_3] : memref<256x128xf32, #tpu.memory_space<vmem>>, vector<256x128xf32>
    %c0_4 = arith.constant 0 : index
    %c0_5 = arith.constant 0 : index
    %5 = vector.load %arg5[%c0_4, %c0_5] : memref<1x128xf32, #tpu.memory_space<vmem>>, vector<1x128xf32>
    %6 = vector.shape_cast %5 : vector<1x128xf32> to vector<1x128xf32>
    %7 = vector.broadcast %6 : vector<1x128xf32> to vector<8x128xf32>
    %c0_6 = arith.constant 0 : index
    %c0_7 = arith.constant 0 : index
    %8 = vector.load %arg7[%c0_6, %c0_7] : memref<8x128xf32, #tpu.memory_space<vmem>>, vector<8x128xf32>
    %c0_i32_8 = arith.constant 0 : i32
    %9 = arith.index_cast %c0_i32_8 : i32 to index
    %c0_9 = arith.constant 0 : index
    %c0_10 = arith.constant 0 : index
    %10 = vector.load %arg1[%9, %c0_9, %c0_10] : memref<8x8x256xf32, #tpu.memory_space<vmem>>, vector<1x8x256xf32>
    %11 = vector.shape_cast %10 : vector<1x8x256xf32> to vector<8x256xf32>
    %cst = arith.constant dense<0.000000e+00> : vector<8x256xf32>
    %12 = tpu.matmul %8, %3, %cst {dimension_numbers = #tpu.dot_dimension_numbers<[1], [0], [0], [1], [0, 0, 1, 1], [], []>} : vector<8x128xf32>, vector<128x256xf32>, vector<8x256xf32> -> vector<8x256xf32>
    %13 = arith.addf %11, %12 : vector<8x256xf32>
    %14 = vector.extract_strided_slice %13 {offsets = [0, 0], sizes = [8, 128], strides = [1, 1]} : vector<8x256xf32> to vector<8x128xf32>
    %cst_11 = arith.constant dense<0.000000e+00> : vector<8x128xf32>
    %15 = tpu.matmul %13, %4, %cst_11 {dimension_numbers = #tpu.dot_dimension_numbers<[1], [0], [0], [1], [0, 0, 1, 1], [], []>} : vector<8x256xf32>, vector<256x128xf32>, vector<8x128xf32> -> vector<8x128xf32>
    %16 = arith.addf %15, %7 : vector<8x128xf32>
    %cst_12 = arith.constant dense<0xFF800000> : vector<8xf32>
    %17 = vector.multi_reduction <maximumf>, %16, %cst_12 [1] : vector<8x128xf32> to vector<8xf32>
    %18 = vector.shape_cast %17 : vector<8xf32> to vector<8x1xf32>
    %19 = vector.broadcast %18 : vector<8x1xf32> to vector<8x128xf32>
    %20 = arith.subf %16, %19 : vector<8x128xf32>
    %21 = math.exp %20 : vector<8x128xf32>
    %cst_13 = arith.constant dense<0.000000e+00> : vector<8xf32>
    %22 = vector.multi_reduction <add>, %21, %cst_13 [1] : vector<8x128xf32> to vector<8xf32>
    %23 = vector.shape_cast %22 : vector<8xf32> to vector<8x1xf32>
    %24 = math.log %23 : vector<8x1xf32>
    %25 = vector.broadcast %24 : vector<8x1xf32> to vector<8x128xf32>
    %26 = arith.subf %20, %25 : vector<8x128xf32>
    %27 = arith.index_cast %c0_i32_8 : i32 to index
    %c0_14 = arith.constant 0 : index
    %c0_15 = arith.constant 0 : index
    %28 = vector.load %arg6[%27, %c0_14, %c0_15] : memref<8x8x128xf32, #tpu.memory_space<vmem>>, vector<1x8x128xf32>
    %29 = vector.shape_cast %28 : vector<1x8x128xf32> to vector<8x128xf32>
    %30 = vector.shape_cast %26 : vector<8x128xf32> to vector<1x8x128xf32>
    tpu.vector_store %arg6[%27, %c0_14, %c0_15], %30 {strides = array<i32>} : memref<8x8x128xf32, #tpu.memory_space<vmem>>, vector<1x8x128xf32>,
    %c1_i32 = arith.constant 1 : i32
    %31 = arith.index_cast %c1_i32 : i32 to index
    %c0_16 = arith.constant 0 : index
    %c0_17 = arith.constant 0 : index
    %32 = vector.load %arg1[%31, %c0_16, %c0_17] : memref<8x8x256xf32, #tpu.memory_space<vmem>>, vector<1x8x256xf32>
    %33 = vector.shape_cast %32 : vector<1x8x256xf32> to vector<8x256xf32>
    %cst_18 = arith.constant dense<0.000000e+00> : vector<8x256xf32>
    %34 = tpu.matmul %14, %3, %cst_18 {dimension_numbers = #tpu.dot_dimension_numbers<[1], [0], [0], [1], [0, 0, 1, 1], [], []>} : vector<8x128xf32>, vector<128x256xf32>, vector<8x256xf32> -> vector<8x256xf32>
    %35 = arith.addf %33, %34 : vector<8x256xf32>
    %36 = vector.extract_strided_slice %35 {offsets = [0, 0], sizes = [8, 128], strides = [1, 1]} : vector<8x256xf32> to vector<8x128xf32>
    %cst_19 = arith.constant dense<0.000000e+00> : vector<8x128xf32>
    %37 = tpu.matmul %35, %4, %cst_19 {dimension_numbers = #tpu.dot_dimension_numbers<[1], [0], [0], [1], [0, 0, 1, 1], [], []>} : vector<8x256xf32>, vector<256x128xf32>, vector<8x128xf32> -> vector<8x128xf32>
    %38 = arith.addf %37, %7 : vector<8x128xf32>
    %cst_20 = arith.constant dense<0xFF800000> : vector<8xf32>
    %39 = vector.multi_reduction <maximumf>, %38, %cst_20 [1] : vector<8x128xf32> to vector<8xf32>
    %40 = vector.shape_cast %39 : vector<8xf32> to vector<8x1xf32>
    %41 = vector.broadcast %40 : vector<8x1xf32> to vector<8x128xf32>
    %42 = arith.subf %38, %41 : vector<8x128xf32>
    %43 = math.exp %42 : vector<8x128xf32>
    %cst_21 = arith.constant dense<0.000000e+00> : vector<8xf32>
    %44 = vector.multi_reduction <add>, %43, %cst_21 [1] : vector<8x128xf32> to vector<8xf32>
    %45 = vector.shape_cast %44 : vector<8xf32> to vector<8x1xf32>
    %46 = math.log %45 : vector<8x1xf32>
    %47 = vector.broadcast %46 : vector<8x1xf32> to vector<8x128xf32>
    %48 = arith.subf %42, %47 : vector<8x128xf32>
    %49 = arith.index_cast %c1_i32 : i32 to index
    %c0_22 = arith.constant 0 : index
    %c0_23 = arith.constant 0 : index
    %50 = vector.load %arg6[%49, %c0_22, %c0_23] : memref<8x8x128xf32, #tpu.memory_space<vmem>>, vector<1x8x128xf32>
    %51 = vector.shape_cast %50 : vector<1x8x128xf32> to vector<8x128xf32>
    %52 = vector.shape_cast %48 : vector<8x128xf32> to vector<1x8x128xf32>
    tpu.vector_store %arg6[%49, %c0_22, %c0_23], %52 {strides = array<i32>} : memref<8x8x128xf32, #tpu.memory_space<vmem>>, vector<1x8x128xf32>,
    %c2_i32 = arith.constant 2 : i32
    %53 = arith.index_cast %c2_i32 : i32 to index
    %c0_24 = arith.constant 0 : index
    %c0_25 = arith.constant 0 : index
    %54 = vector.load %arg1[%53, %c0_24, %c0_25] : memref<8x8x256xf32, #tpu.memory_space<vmem>>, vector<1x8x256xf32>
    %55 = vector.shape_cast %54 : vector<1x8x256xf32> to vector<8x256xf32>
    %cst_26 = arith.constant dense<0.000000e+00> : vector<8x256xf32>
    %56 = tpu.matmul %36, %3, %cst_26 {dimension_numbers = #tpu.dot_dimension_numbers<[1], [0], [0], [1], [0, 0, 1, 1], [], []>} : vector<8x128xf32>, vector<128x256xf32>, vector<8x256xf32> -> vector<8x256xf32>
    %57 = arith.addf %55, %56 : vector<8x256xf32>
    %58 = vector.extract_strided_slice %57 {offsets = [0, 0], sizes = [8, 128], strides = [1, 1]} : vector<8x256xf32> to vector<8x128xf32>
    %cst_27 = arith.constant dense<0.000000e+00> : vector<8x128xf32>
    %59 = tpu.matmul %57, %4, %cst_27 {dimension_numbers = #tpu.dot_dimension_numbers<[1], [0], [0], [1], [0, 0, 1, 1], [], []>} : vector<8x256xf32>, vector<256x128xf32>, vector<8x128xf32> -> vector<8x128xf32>
    %60 = arith.addf %59, %7 : vector<8x128xf32>
    %cst_28 = arith.constant dense<0xFF800000> : vector<8xf32>
    %61 = vector.multi_reduction <maximumf>, %60, %cst_28 [1] : vector<8x128xf32> to vector<8xf32>
    %62 = vector.shape_cast %61 : vector<8xf32> to vector<8x1xf32>
    %63 = vector.broadcast %62 : vector<8x1xf32> to vector<8x128xf32>
    %64 = arith.subf %60, %63 : vector<8x128xf32>
    %65 = math.exp %64 : vector<8x128xf32>
    %cst_29 = arith.constant dense<0.000000e+00> : vector<8xf32>
    %66 = vector.multi_reduction <add>, %65, %cst_29 [1] : vector<8x128xf32> to vector<8xf32>
    %67 = vector.shape_cast %66 : vector<8xf32> to vector<8x1xf32>
    %68 = math.log %67 : vector<8x1xf32>
    %69 = vector.broadcast %68 : vector<8x1xf32> to vector<8x128xf32>
    %70 = arith.subf %64, %69 : vector<8x128xf32>
    %71 = arith.index_cast %c2_i32 : i32 to index
    %c0_30 = arith.constant 0 : index
    %c0_31 = arith.constant 0 : index
    %72 = vector.load %arg6[%71, %c0_30, %c0_31] : memref<8x8x128xf32, #tpu.memory_space<vmem>>, vector<1x8x128xf32>
    %73 = vector.shape_cast %72 : vector<1x8x128xf32> to vector<8x128xf32>
    %74 = vector.shape_cast %70 : vector<8x128xf32> to vector<1x8x128xf32>
    tpu.vector_store %arg6[%71, %c0_30, %c0_31], %74 {strides = array<i32>} : memref<8x8x128xf32, #tpu.memory_space<vmem>>, vector<1x8x128xf32>,
    %c3_i32 = arith.constant 3 : i32
    %75 = arith.index_cast %c3_i32 : i32 to index
    %c0_32 = arith.constant 0 : index
    %c0_33 = arith.constant 0 : index
    %76 = vector.load %arg1[%75, %c0_32, %c0_33] : memref<8x8x256xf32, #tpu.memory_space<vmem>>, vector<1x8x256xf32>
    %77 = vector.shape_cast %76 : vector<1x8x256xf32> to vector<8x256xf32>
    %cst_34 = arith.constant dense<0.000000e+00> : vector<8x256xf32>
    %78 = tpu.matmul %58, %3, %cst_34 {dimension_numbers = #tpu.dot_dimension_numbers<[1], [0], [0], [1], [0, 0, 1, 1], [], []>} : vector<8x128xf32>, vector<128x256xf32>, vector<8x256xf32> -> vector<8x256xf32>
    %79 = arith.addf %77, %78 : vector<8x256xf32>
    %80 = vector.extract_strided_slice %79 {offsets = [0, 0], sizes = [8, 128], strides = [1, 1]} : vector<8x256xf32> to vector<8x128xf32>
    %cst_35 = arith.constant dense<0.000000e+00> : vector<8x128xf32>
    %81 = tpu.matmul %79, %4, %cst_35 {dimension_numbers = #tpu.dot_dimension_numbers<[1], [0], [0], [1], [0, 0, 1, 1], [], []>} : vector<8x256xf32>, vector<256x128xf32>, vector<8x128xf32> -> vector<8x128xf32>
    %82 = arith.addf %81, %7 : vector<8x128xf32>
    %cst_36 = arith.constant dense<0xFF800000> : vector<8xf32>
    %83 = vector.multi_reduction <maximumf>, %82, %cst_36 [1] : vector<8x128xf32> to vector<8xf32>
    %84 = vector.shape_cast %83 : vector<8xf32> to vector<8x1xf32>
    %85 = vector.broadcast %84 : vector<8x1xf32> to vector<8x128xf32>
    %86 = arith.subf %82, %85 : vector<8x128xf32>
    %87 = math.exp %86 : vector<8x128xf32>
    %cst_37 = arith.constant dense<0.000000e+00> : vector<8xf32>
    %88 = vector.multi_reduction <add>, %87, %cst_37 [1] : vector<8x128xf32> to vector<8xf32>
    %89 = vector.shape_cast %88 : vector<8xf32> to vector<8x1xf32>
    %90 = math.log %89 : vector<8x1xf32>
    %91 = vector.broadcast %90 : vector<8x1xf32> to vector<8x128xf32>
    %92 = arith.subf %86, %91 : vector<8x128xf32>
    %93 = arith.index_cast %c3_i32 : i32 to index
    %c0_38 = arith.constant 0 : index
    %c0_39 = arith.constant 0 : index
    %94 = vector.load %arg6[%93, %c0_38, %c0_39] : memref<8x8x128xf32, #tpu.memory_space<vmem>>, vector<1x8x128xf32>
    %95 = vector.shape_cast %94 : vector<1x8x128xf32> to vector<8x128xf32>
    %96 = vector.shape_cast %92 : vector<8x128xf32> to vector<1x8x128xf32>
    tpu.vector_store %arg6[%93, %c0_38, %c0_39], %96 {strides = array<i32>} : memref<8x8x128xf32, #tpu.memory_space<vmem>>, vector<1x8x128xf32>,
    %c4_i32 = arith.constant 4 : i32
    %97 = arith.index_cast %c4_i32 : i32 to index
    %c0_40 = arith.constant 0 : index
    %c0_41 = arith.constant 0 : index
    %98 = vector.load %arg1[%97, %c0_40, %c0_41] : memref<8x8x256xf32, #tpu.memory_space<vmem>>, vector<1x8x256xf32>
    %99 = vector.shape_cast %98 : vector<1x8x256xf32> to vector<8x256xf32>
    %cst_42 = arith.constant dense<0.000000e+00> : vector<8x256xf32>
    %100 = tpu.matmul %80, %3, %cst_42 {dimension_numbers = #tpu.dot_dimension_numbers<[1], [0], [0], [1], [0, 0, 1, 1], [], []>} : vector<8x128xf32>, vector<128x256xf32>, vector<8x256xf32> -> vector<8x256xf32>
    %101 = arith.addf %99, %100 : vector<8x256xf32>
    %102 = vector.extract_strided_slice %101 {offsets = [0, 0], sizes = [8, 128], strides = [1, 1]} : vector<8x256xf32> to vector<8x128xf32>
    %cst_43 = arith.constant dense<0.000000e+00> : vector<8x128xf32>
    %103 = tpu.matmul %101, %4, %cst_43 {dimension_numbers = #tpu.dot_dimension_numbers<[1], [0], [0], [1], [0, 0, 1, 1], [], []>} : vector<8x256xf32>, vector<256x128xf32>, vector<8x128xf32> -> vector<8x128xf32>
    %104 = arith.addf %103, %7 : vector<8x128xf32>
    %cst_44 = arith.constant dense<0xFF800000> : vector<8xf32>
    %105 = vector.multi_reduction <maximumf>, %104, %cst_44 [1] : vector<8x128xf32> to vector<8xf32>
    %106 = vector.shape_cast %105 : vector<8xf32> to vector<8x1xf32>
    %107 = vector.broadcast %106 : vector<8x1xf32> to vector<8x128xf32>
    %108 = arith.subf %104, %107 : vector<8x128xf32>
    %109 = math.exp %108 : vector<8x128xf32>
    %cst_45 = arith.constant dense<0.000000e+00> : vector<8xf32>
    %110 = vector.multi_reduction <add>, %109, %cst_45 [1] : vector<8x128xf32> to vector<8xf32>
    %111 = vector.shape_cast %110 : vector<8xf32> to vector<8x1xf32>
    %112 = math.log %111 : vector<8x1xf32>
    %113 = vector.broadcast %112 : vector<8x1xf32> to vector<8x128xf32>
    %114 = arith.subf %108, %113 : vector<8x128xf32>
    %115 = arith.index_cast %c4_i32 : i32 to index
    %c0_46 = arith.constant 0 : index
    %c0_47 = arith.constant 0 : index
    %116 = vector.load %arg6[%115, %c0_46, %c0_47] : memref<8x8x128xf32, #tpu.memory_space<vmem>>, vector<1x8x128xf32>
    %117 = vector.shape_cast %116 : vector<1x8x128xf32> to vector<8x128xf32>
    %118 = vector.shape_cast %114 : vector<8x128xf32> to vector<1x8x128xf32>
    tpu.vector_store %arg6[%115, %c0_46, %c0_47], %118 {strides = array<i32>} : memref<8x8x128xf32, #tpu.memory_space<vmem>>, vector<1x8x128xf32>,
    %c5_i32 = arith.constant 5 : i32
    %119 = arith.index_cast %c5_i32 : i32 to index
    %c0_48 = arith.constant 0 : index
    %c0_49 = arith.constant 0 : index
    %120 = vector.load %arg1[%119, %c0_48, %c0_49] : memref<8x8x256xf32, #tpu.memory_space<vmem>>, vector<1x8x256xf32>
    %121 = vector.shape_cast %120 : vector<1x8x256xf32> to vector<8x256xf32>
    %cst_50 = arith.constant dense<0.000000e+00> : vector<8x256xf32>
    %122 = tpu.matmul %102, %3, %cst_50 {dimension_numbers = #tpu.dot_dimension_numbers<[1], [0], [0], [1], [0, 0, 1, 1], [], []>} : vector<8x128xf32>, vector<128x256xf32>, vector<8x256xf32> -> vector<8x256xf32>
    %123 = arith.addf %121, %122 : vector<8x256xf32>
    %124 = vector.extract_strided_slice %123 {offsets = [0, 0], sizes = [8, 128], strides = [1, 1]} : vector<8x256xf32> to vector<8x128xf32>
    %cst_51 = arith.constant dense<0.000000e+00> : vector<8x128xf32>
    %125 = tpu.matmul %123, %4, %cst_51 {dimension_numbers = #tpu.dot_dimension_numbers<[1], [0], [0], [1], [0, 0, 1, 1], [], []>} : vector<8x256xf32>, vector<256x128xf32>, vector<8x128xf32> -> vector<8x128xf32>
    %126 = arith.addf %125, %7 : vector<8x128xf32>
    %cst_52 = arith.constant dense<0xFF800000> : vector<8xf32>
    %127 = vector.multi_reduction <maximumf>, %126, %cst_52 [1] : vector<8x128xf32> to vector<8xf32>
    %128 = vector.shape_cast %127 : vector<8xf32> to vector<8x1xf32>
    %129 = vector.broadcast %128 : vector<8x1xf32> to vector<8x128xf32>
    %130 = arith.subf %126, %129 : vector<8x128xf32>
    %131 = math.exp %130 : vector<8x128xf32>
    %cst_53 = arith.constant dense<0.000000e+00> : vector<8xf32>
    %132 = vector.multi_reduction <add>, %131, %cst_53 [1] : vector<8x128xf32> to vector<8xf32>
    %133 = vector.shape_cast %132 : vector<8xf32> to vector<8x1xf32>
    %134 = math.log %133 : vector<8x1xf32>
    %135 = vector.broadcast %134 : vector<8x1xf32> to vector<8x128xf32>
    %136 = arith.subf %130, %135 : vector<8x128xf32>
    %137 = arith.index_cast %c5_i32 : i32 to index
    %c0_54 = arith.constant 0 : index
    %c0_55 = arith.constant 0 : index
    %138 = vector.load %arg6[%137, %c0_54, %c0_55] : memref<8x8x128xf32, #tpu.memory_space<vmem>>, vector<1x8x128xf32>
    %139 = vector.shape_cast %138 : vector<1x8x128xf32> to vector<8x128xf32>
    %140 = vector.shape_cast %136 : vector<8x128xf32> to vector<1x8x128xf32>
    tpu.vector_store %arg6[%137, %c0_54, %c0_55], %140 {strides = array<i32>} : memref<8x8x128xf32, #tpu.memory_space<vmem>>, vector<1x8x128xf32>,
    %c6_i32 = arith.constant 6 : i32
    %141 = arith.index_cast %c6_i32 : i32 to index
    %c0_56 = arith.constant 0 : index
    %c0_57 = arith.constant 0 : index
    %142 = vector.load %arg1[%141, %c0_56, %c0_57] : memref<8x8x256xf32, #tpu.memory_space<vmem>>, vector<1x8x256xf32>
    %143 = vector.shape_cast %142 : vector<1x8x256xf32> to vector<8x256xf32>
    %cst_58 = arith.constant dense<0.000000e+00> : vector<8x256xf32>
    %144 = tpu.matmul %124, %3, %cst_58 {dimension_numbers = #tpu.dot_dimension_numbers<[1], [0], [0], [1], [0, 0, 1, 1], [], []>} : vector<8x128xf32>, vector<128x256xf32>, vector<8x256xf32> -> vector<8x256xf32>
    %145 = arith.addf %143, %144 : vector<8x256xf32>
    %146 = vector.extract_strided_slice %145 {offsets = [0, 0], sizes = [8, 128], strides = [1, 1]} : vector<8x256xf32> to vector<8x128xf32>
    %cst_59 = arith.constant dense<0.000000e+00> : vector<8x128xf32>
    %147 = tpu.matmul %145, %4, %cst_59 {dimension_numbers = #tpu.dot_dimension_numbers<[1], [0], [0], [1], [0, 0, 1, 1], [], []>} : vector<8x256xf32>, vector<256x128xf32>, vector<8x128xf32> -> vector<8x128xf32>
    %148 = arith.addf %147, %7 : vector<8x128xf32>
    %cst_60 = arith.constant dense<0xFF800000> : vector<8xf32>
    %149 = vector.multi_reduction <maximumf>, %148, %cst_60 [1] : vector<8x128xf32> to vector<8xf32>
    %150 = vector.shape_cast %149 : vector<8xf32> to vector<8x1xf32>
    %151 = vector.broadcast %150 : vector<8x1xf32> to vector<8x128xf32>
    %152 = arith.subf %148, %151 : vector<8x128xf32>
    %153 = math.exp %152 : vector<8x128xf32>
    %cst_61 = arith.constant dense<0.000000e+00> : vector<8xf32>
    %154 = vector.multi_reduction <add>, %153, %cst_61 [1] : vector<8x128xf32> to vector<8xf32>
    %155 = vector.shape_cast %154 : vector<8xf32> to vector<8x1xf32>
    %156 = math.log %155 : vector<8x1xf32>
    %157 = vector.broadcast %156 : vector<8x1xf32> to vector<8x128xf32>
    %158 = arith.subf %152, %157 : vector<8x128xf32>
    %159 = arith.index_cast %c6_i32 : i32 to index
    %c0_62 = arith.constant 0 : index
    %c0_63 = arith.constant 0 : index
    %160 = vector.load %arg6[%159, %c0_62, %c0_63] : memref<8x8x128xf32, #tpu.memory_space<vmem>>, vector<1x8x128xf32>
    %161 = vector.shape_cast %160 : vector<1x8x128xf32> to vector<8x128xf32>
    %162 = vector.shape_cast %158 : vector<8x128xf32> to vector<1x8x128xf32>
    tpu.vector_store %arg6[%159, %c0_62, %c0_63], %162 {strides = array<i32>} : memref<8x8x128xf32, #tpu.memory_space<vmem>>, vector<1x8x128xf32>,
    %c7_i32 = arith.constant 7 : i32
    %163 = arith.index_cast %c7_i32 : i32 to index
    %c0_64 = arith.constant 0 : index
    %c0_65 = arith.constant 0 : index
    %164 = vector.load %arg1[%163, %c0_64, %c0_65] : memref<8x8x256xf32, #tpu.memory_space<vmem>>, vector<1x8x256xf32>
    %165 = vector.shape_cast %164 : vector<1x8x256xf32> to vector<8x256xf32>
    %cst_66 = arith.constant dense<0.000000e+00> : vector<8x256xf32>
    %166 = tpu.matmul %146, %3, %cst_66 {dimension_numbers = #tpu.dot_dimension_numbers<[1], [0], [0], [1], [0, 0, 1, 1], [], []>} : vector<8x128xf32>, vector<128x256xf32>, vector<8x256xf32> -> vector<8x256xf32>
    %167 = arith.addf %165, %166 : vector<8x256xf32>
    %168 = vector.extract_strided_slice %167 {offsets = [0, 0], sizes = [8, 128], strides = [1, 1]} : vector<8x256xf32> to vector<8x128xf32>
    %cst_67 = arith.constant dense<0.000000e+00> : vector<8x128xf32>
    %169 = tpu.matmul %167, %4, %cst_67 {dimension_numbers = #tpu.dot_dimension_numbers<[1], [0], [0], [1], [0, 0, 1, 1], [], []>} : vector<8x256xf32>, vector<256x128xf32>, vector<8x128xf32> -> vector<8x128xf32>
    %170 = arith.addf %169, %7 : vector<8x128xf32>
    %cst_68 = arith.constant dense<0xFF800000> : vector<8xf32>
    %171 = vector.multi_reduction <maximumf>, %170, %cst_68 [1] : vector<8x128xf32> to vector<8xf32>
    %172 = vector.shape_cast %171 : vector<8xf32> to vector<8x1xf32>
    %173 = vector.broadcast %172 : vector<8x1xf32> to vector<8x128xf32>
    %174 = arith.subf %170, %173 : vector<8x128xf32>
    %175 = math.exp %174 : vector<8x128xf32>
    %cst_69 = arith.constant dense<0.000000e+00> : vector<8xf32>
    %176 = vector.multi_reduction <add>, %175, %cst_69 [1] : vector<8x128xf32> to vector<8xf32>
    %177 = vector.shape_cast %176 : vector<8xf32> to vector<8x1xf32>
    %178 = math.log %177 : vector<8x1xf32>
    %179 = vector.broadcast %178 : vector<8x1xf32> to vector<8x128xf32>
    %180 = arith.subf %174, %179 : vector<8x128xf32>
    %181 = arith.index_cast %c7_i32 : i32 to index
    %c0_70 = arith.constant 0 : index
    %c0_71 = arith.constant 0 : index
    %182 = vector.load %arg6[%181, %c0_70, %c0_71] : memref<8x8x128xf32, #tpu.memory_space<vmem>>, vector<1x8x128xf32>
    %183 = vector.shape_cast %182 : vector<1x8x128xf32> to vector<8x128xf32>
    %184 = vector.shape_cast %180 : vector<8x128xf32> to vector<1x8x128xf32>
    tpu.vector_store %arg6[%181, %c0_70, %c0_71], %184 {strides = array<i32>} : memref<8x8x128xf32, #tpu.memory_space<vmem>>, vector<1x8x128xf32>,
    %c8_i32 = arith.constant 8 : i32
    %c0_72 = arith.constant 0 : index
    %c0_73 = arith.constant 0 : index
    %185 = vector.load %arg7[%c0_72, %c0_73] : memref<8x128xf32, #tpu.memory_space<vmem>>, vector<8x128xf32>
    tpu.vector_store %arg7[%c0_72, %c0_73], %168 {strides = array<i32>} : memref<8x128xf32, #tpu.memory_space<vmem>>, vector<8x128xf32>,
    return
  }
  func.func @transform_0(%arg0: i32) -> (i32, i32, i32) {
    %c0_i32 = arith.constant 0 : i32
    %c0_i32_0 = arith.constant 0 : i32
    %c0_i32_1 = arith.constant 0 : i32
    return %arg0, %c0_i32, %c0_i32_0 : i32, i32, i32
  }
  func.func @transform_1(%arg0: i32) -> (i32, i32) {
    %c0_i32 = arith.constant 0 : i32
    %c0_i32_0 = arith.constant 0 : i32
    %c0_i32_1 = arith.constant 0 : i32
    return %c0_i32, %c0_i32_0 : i32, i32
  }
  func.func @transform_2(%arg0: i32) -> (i32, i32) {
    %c0_i32 = arith.constant 0 : i32
    %c0_i32_0 = arith.constant 0 : i32
    %c0_i32_1 = arith.constant 0 : i32
    return %c0_i32, %c0_i32_0 : i32, i32
  }
  func.func @transform_3(%arg0: i32) -> (i32, i32) {
    %c0_i32 = arith.constant 0 : i32
    %c0_i32_0 = arith.constant 0 : i32
    %c0_i32_1 = arith.constant 0 : i32
    return %c0_i32, %c0_i32_0 : i32, i32
  }
  func.func @transform_4(%arg0: i32) -> (i32, i32) {
    %c0_i32 = arith.constant 0 : i32
    %c0_i32_0 = arith.constant 0 : i32
    %c0_i32_1 = arith.constant 0 : i32
    return %c0_i32, %c0_i32_0 : i32, i32
  }
  func.func @transform_5(%arg0: i32) -> (i32, i32, i32) {
    %c0_i32 = arith.constant 0 : i32
    %c0_i32_0 = arith.constant 0 : i32
    %c0_i32_1 = arith.constant 0 : i32
    return %arg0, %c0_i32, %c0_i32_0 : i32, i32, i32
  }
  func.func @transform_6(%arg0: i32) -> (i32, i32) {
    %c0_i32 = arith.constant 0 : i32
    %c0_i32_0 = arith.constant 0 : i32
    %c0_i32_1 = arith.constant 0 : i32
    return %c0_i32, %c0_i32_0 : i32, i32
  }
}

</mosaic_0001>

<llo_original>
// kernel: tpu_custom_call.1
$region0: #{tpu_custom_call.1}
  #allocation0 [shape = 'u32[]', space=smem, size = 0x4, offset = 0x4, fixed_abs, tag = 'smem constant byte address 0x4 - core index']
  #allocation1 [shape = 'u32[144,128]{1,0:T(1,128)}', space=vmem, size = 0x12000, scoped, tag = 'internal scratch']
  %s0 = inlined_call_operand.hbm [shape: f32[8,8,256], index: 0, kind: input, shape index: {}]
  %s1 = inlined_call_operand.hbm [shape: f32[8,128], index: 1, kind: input, shape index: {}]
  %s2 = inlined_call_operand.hbm [shape: f32[128,256], index: 2, kind: input, shape index: {}]
  %s3 = inlined_call_operand.hbm [shape: f32[256,128], index: 3, kind: input, shape index: {}]
  %s4 = inlined_call_operand.vmem [shape: f32[1,128], index: 4, kind: input, shape index: {}]
  %s5 = inlined_call_operand.hbm [shape: f32[8,8,128], index: 5, kind: output, shape index: {0}]
  %s6 = inlined_call_operand.hbm [shape: f32[8,128], index: 6, kind: output, shape index: {1}]
  %7 = xla_tuple %s5, %s6
  %s8 = sld [smem:[#allocation0]]
  $region58: #{tpu_custom_call.1} parent=0
    _
  %s10 = ssub.s32 1, %s8
  %s11 = scalar_select 0, %s10, %s8
  $region1: #{tpu_custom_call.1} parent=0
    #allocation2 [shape = 'u8[65536]{0}', space=vmem, size = 0x10000, scoped, tag = 'input window, operand 0, single buffered']
    #allocation3 [shape = 's32[1]{0}', space=sflag, size = 0x4, scoped, tag = 'scoped memory for tpu_custom_call.1']
    #allocation4 [shape = 's32[1]{0}', space=sflag, size = 0x4, scoped, tag = 'scoped memory for tpu_custom_call.1']
    #allocation5 [shape = 'u8[4096]{0}', space=vmem, size = 0x1000, scoped, tag = 'input window, operand 1, single buffered']
    #allocation6 [shape = 's32[1]{0}', space=sflag, size = 0x4, scoped, tag = 'scoped memory for tpu_custom_call.1']
    #allocation7 [shape = 'u8[131072]{0}', space=vmem, size = 0x20000, scoped, tag = 'input window, operand 2, single buffered']
    #allocation8 [shape = 'u8[131072]{0}', space=vmem, size = 0x20000, scoped, tag = 'input window, operand 3, single buffered']
    #allocation9 [shape = 's32[1]{0}', space=sflag, size = 0x4, scoped, tag = 'scoped memory for tpu_custom_call.1']
    #allocation10 [shape = 'u8[32768]{0}', space=vmem, size = 0x8000, scoped, tag = 'output window, operand 0, single buffered']
    #allocation11 [shape = 'u8[4096]{0}', space=vmem, size = 0x1000, scoped, tag = 'output window, operand 1, single buffered']
    #allocation12 [shape = 's32[1]{0}', space=sflag, size = 0x4, scoped, tag = 'scoped memory for tpu_custom_call.1']
    %12 = vsyncpa [#allocation3], 0
    %13 = vsyncpa [#allocation6], 0
    %14 = vsyncpa [#allocation9], 0
    %15 = vsyncpa [#allocation4], 0
    %16 = vsyncpa [#allocation12], 0
    // Predicated region
    $region2: #{tpu_custom_call.1} parent=1 // pred_check
      _
    $region3: #{tpu_custom_call.1} parent=1 // pred_check_branch
      %18 = sbr.rel (0) target = $region5
    $region4: #{tpu_custom_call.1} parent=1 // pred_region
      %s20 = ssub.s32 2048, 2048
      %21 = vsyncadd [#allocation3], %s20
      %s22 = sshll.u32 [#allocation2], 4
      %s23 = int_to_ptr.vmem [resolvable:$true] %s22
      %28 = dma.hbm_to_vmem [thread:$0]  %s0, 2048, %s23, [#allocation3], 256, 256, 16
    $region5: #{tpu_custom_call.1} parent=1 // pred_fallthru
      _
    // Predicated region
    $region6: #{tpu_custom_call.1} parent=1 // pred_check
      _
    $region7: #{tpu_custom_call.1} parent=1 // pred_check_branch
      %30 = sbr.rel (0) target = $region9
    $region8: #{tpu_custom_call.1} parent=1 // pred_region
      %s32 = ssub.s32 128, 128
      %33 = vsyncadd [#allocation6], %s32
      %s35 = sshll.u32 [#allocation5], 4
      %s36 = int_to_ptr.vmem [resolvable:$true] %s35
      %38 = dma.hbm_to_vmem [thread:$0]  %s1, 128, %s36, [#allocation6]
    $region9: #{tpu_custom_call.1} parent=1 // pred_fallthru
      _
    // Predicated region
    $region10: #{tpu_custom_call.1} parent=1 // pred_check
      _
    $region11: #{tpu_custom_call.1} parent=1 // pred_check_branch
      %40 = sbr.rel (0) target = $region13
    $region12: #{tpu_custom_call.1} parent=1 // pred_region
      %s42 = ssub.s32 4096, 4096
      %43 = vsyncadd [#allocation6], %s42
      %s44 = sshll.u32 [#allocation7], 4
      %s45 = int_to_ptr.vmem [resolvable:$true] %s44
      %50 = dma.hbm_to_vmem [thread:$0]  %s2, 4096, %s45, [#allocation6], 256, 256, 16
    $region13: #{tpu_custom_call.1} parent=1 // pred_fallthru
      _
    // Predicated region
    $region14: #{tpu_custom_call.1} parent=1 // pred_check
      _
    $region15: #{tpu_custom_call.1} parent=1 // pred_check_branch
      %52 = sbr.rel (0) target = $region17
    $region16: #{tpu_custom_call.1} parent=1 // pred_region
      %s54 = ssub.s32 4096, 4096
      %55 = vsyncadd [#allocation9], %s54
      %s56 = sshll.u32 [#allocation8], 4
      %s57 = int_to_ptr.vmem [resolvable:$true] %s56
      %62 = dma.hbm_to_vmem [thread:$0]  %s3, 4096, %s57, [#allocation9], 128, 128, 8
    $region17: #{tpu_custom_call.1} parent=1 // pred_fallthru
      _
    // Predicated region
    $region18: #{tpu_custom_call.1} parent=1 // pred_check
      _
    $region19: #{tpu_custom_call.1} parent=1 // pred_check_branch
      %64 = sbr.rel (0) target = $region21
    $region20: #{tpu_custom_call.1} parent=1 // pred_region
      _
    $region21: #{tpu_custom_call.1} parent=1 // pred_fallthru
      _
    // Predicated region
    $region22: #{tpu_custom_call.1} parent=1 // pred_check
      _
    $region23: #{tpu_custom_call.1} parent=1 // pred_check_branch
      %66 = sbr.rel (0) target = $region25
    $region24: #{tpu_custom_call.1} parent=1 // pred_region
      %67 = dma.done [#allocation3], 2048
    $region25: #{tpu_custom_call.1} parent=1 // pred_fallthru
      _
    // Predicated region
    $region26: #{tpu_custom_call.1} parent=1 // pred_check
      _
    $region27: #{tpu_custom_call.1} parent=1 // pred_check_branch
      %69 = sbr.rel (0) target = $region29
    $region28: #{tpu_custom_call.1} parent=1 // pred_region
      %70 = dma.done [#allocation6], 128
    $region29: #{tpu_custom_call.1} parent=1 // pred_fallthru
      _
    // Predicated region
    $region30: #{tpu_custom_call.1} parent=1 // pred_check
      _
    $region31: #{tpu_custom_call.1} parent=1 // pred_check_branch
      %72 = sbr.rel (0) target = $region33
    $region32: #{tpu_custom_call.1} parent=1 // pred_region
      %73 = dma.done [#allocation6], 4096
    $region33: #{tpu_custom_call.1} parent=1 // pred_fallthru
      _
    // Predicated region
    $region34: #{tpu_custom_call.1} parent=1 // pred_check
      _
    $region35: #{tpu_custom_call.1} parent=1 // pred_check_branch
      %75 = sbr.rel (0) target = $region37
    $region36: #{tpu_custom_call.1} parent=1 // pred_region
      %76 = dma.done [#allocation9], 4096
    $region37: #{tpu_custom_call.1} parent=1 // pred_fallthru
      _
    %p77 = scmp.eq.s32.totalorder 0, 0
    // Predicated region
    $region38: #{tpu_custom_call.1} parent=1 // pred_check
      %p78 = pneg %p77
    $region39: #{tpu_custom_call.1} parent=1 // pred_check_branch
      %80 = sbr.rel (%p78) target = $region41
    $region40: #{tpu_custom_call.1} parent=1 // pred_region
      %v81 = vld [vmem:[#allocation5] sm:$0xff]
      %82 = vst [vmem:[#allocation11] sm:$0xff] %v81
    $region41: #{tpu_custom_call.1} parent=1 // pred_fallthru
      _
    %v83 = vld [vmem:[#allocation7] sm:$0xff]
    %v84 = vld [vmem:[#allocation7 + $0x8] sm:$0xff]
    %v85 = vld [vmem:[#allocation7 + $0x10] sm:$0xff]
    %v86 = vld [vmem:[#allocation7 + $0x18] sm:$0xff]
    %v87 = vld [vmem:[#allocation7 + $0x20] sm:$0xff]
    %v88 = vld [vmem:[#allocation7 + $0x28] sm:$0xff]
    %v89 = vld [vmem:[#allocation7 + $0x30] sm:$0xff]
    %v90 = vld [vmem:[#allocation7 + $0x38] sm:$0xff]
    %v91 = vld [vmem:[#allocation7 + $0x40] sm:$0xff]
    %v92 = vld [vmem:[#allocation7 + $0x48] sm:$0xff]
    %v93 = vld [vmem:[#allocation7 + $0x50] sm:$0xff]
    %v94 = vld [vmem:[#allocation7 + $0x58] sm:$0xff]
    %v95 = vld [vmem:[#allocation7 + $0x60] sm:$0xff]
    %v96 = vld [vmem:[#allocation7 + $0x68] sm:$0xff]
    %v97 = vld [vmem:[#allocation7 + $0x70] sm:$0xff]
    %v98 = vld [vmem:[#allocation7 + $0x78] sm:$0xff]
    %v99 = vld [vmem:[#allocation7 + $0x80] sm:$0xff]
    %v100 = vld [vmem:[#allocation7 + $0x88] sm:$0xff]
    %v101 = vld [vmem:[#allocation7 + $0x90] sm:$0xff]
    %v102 = vld [vmem:[#allocation7 + $0x98] sm:$0xff]
    %v103 = vld [vmem:[#allocation7 + $0xa0] sm:$0xff]
    %v104 = vld [vmem:[#allocation7 + $0xa8] sm:$0xff]
    %v105 = vld [vmem:[#allocation7 + $0xb0] sm:$0xff]
    %v106 = vld [vmem:[#allocation7 + $0xb8] sm:$0xff]
    %v107 = vld [vmem:[#allocation7 + $0xc0] sm:$0xff]
    %v108 = vld [vmem:[#allocation7 + $0xc8] sm:$0xff]
    %v109 = vld [vmem:[#allocation7 + $0xd0] sm:$0xff]
    %v110 = vld [vmem:[#allocation7 + $0xd8] sm:$0xff]
    %v111 = vld [vmem:[#allocation7 + $0xe0] sm:$0xff]
    %v112 = vld [vmem:[#allocation7 + $0xe8] sm:$0xff]
    %v113 = vld [vmem:[#allocation7 + $0xf0] sm:$0xff]
    %v114 = vld [vmem:[#allocation7 + $0xf8] sm:$0xff]
    %v115 = vld [vmem:[#allocation8] sm:$0xff]
    %v116 = vld [vmem:[#allocation8 + $0x8] sm:$0xff]
    %v117 = vld [vmem:[#allocation8 + $0x10] sm:$0xff]
    %v118 = vld [vmem:[#allocation8 + $0x18] sm:$0xff]
    %v119 = vld [vmem:[#allocation8 + $0x20] sm:$0xff]
    %v120 = vld [vmem:[#allocation8 + $0x28] sm:$0xff]
    %v121 = vld [vmem:[#allocation8 + $0x30] sm:$0xff]
    %v122 = vld [vmem:[#allocation8 + $0x38] sm:$0xff]
    %v123 = vld [vmem:[#allocation8 + $0x40] sm:$0xff]
    %v124 = vld [vmem:[#allocation8 + $0x48] sm:$0xff]
    %v125 = vld [vmem:[#allocation8 + $0x50] sm:$0xff]
    %v126 = vld [vmem:[#allocation8 + $0x58] sm:$0xff]
    %v127 = vld [vmem:[#allocation8 + $0x60] sm:$0xff]
    %v128 = vld [vmem:[#allocation8 + $0x68] sm:$0xff]
    %v129 = vld [vmem:[#allocation8 + $0x70] sm:$0xff]
    %v130 = vld [vmem:[#allocation8 + $0x78] sm:$0xff]
    %v131 = vld [vmem:[#allocation8 + $0x80] sm:$0xff]
    %v132 = vld [vmem:[#allocation8 + $0x88] sm:$0xff]
    %v133 = vld [vmem:[#allocation8 + $0x90] sm:$0xff]
    %v134 = vld [vmem:[#allocation8 + $0x98] sm:$0xff]
    %v135 = vld [vmem:[#allocation8 + $0xa0] sm:$0xff]
    %v136 = vld [vmem:[#allocation8 + $0xa8] sm:$0xff]
    %v137 = vld [vmem:[#allocation8 + $0xb0] sm:$0xff]
    %v138 = vld [vmem:[#allocation8 + $0xb8] sm:$0xff]
    %v139 = vld [vmem:[#allocation8 + $0xc0] sm:$0xff]
    %v140 = vld [vmem:[#allocation8 + $0xc8] sm:$0xff]
    %v141 = vld [vmem:[#allocation8 + $0xd0] sm:$0xff]
    %v142 = vld [vmem:[#allocation8 + $0xd8] sm:$0xff]
    %v143 = vld [vmem:[#allocation8 + $0xe0] sm:$0xff]
    %v144 = vld [vmem:[#allocation8 + $0xe8] sm:$0xff]
    %v145 = vld [vmem:[#allocation8 + $0xf0] sm:$0xff]
    %v146 = vld [vmem:[#allocation8 + $0xf8] sm:$0xff]
    %v147 = vld [vmem:[%s4] sm:$0x1]
    %v149 = vlaneseq
    %v150 = vshrl.u32 %v149, 7
    %v151 = vsub.s32 0, %v150
    %v152 = vrot.slane %v147, %v151
    %v154 = vld [vmem:[#allocation11] sm:$0xff]
    %v155 = vld [vmem:[#allocation2] sm:$0xff]
    %v156 = vld [vmem:[#allocation2 + $0x8] sm:$0xff]
    %157 = vmatprep.subr.mxu0 %v114
    %158 = vmatpush1.msra.mxu0 %v113
    %159 = vmatprep.subr.mxu0 %v112
    %160 = vmatpush1.msra.mxu0 %v111
    %161 = vmatprep.subr.mxu0 %v110
    %162 = vmatpush1.msra.mxu0 %v109
    %163 = vmatprep.subr.mxu0 %v108
    %164 = vmatpush1.msra.mxu0 %v107
    %165 = vmatprep.subr.mxu0 %v106
    %166 = vmatpush1.msra.mxu0 %v105
    %167 = vmatprep.subr.mxu0 %v104
    %168 = vmatpush1.msra.mxu0 %v103
    %169 = vmatprep.subr.mxu0 %v102
    %170 = vmatpush1.msra.mxu0 %v101
    %171 = vmatprep.subr.mxu0 %v100
    %172 = vmatpush1.msra.mxu0 %v99
    %173 = vmatprep.subr.mxu0 %v98
    %174 = vmatpush1.msra.mxu0 %v97
    %175 = vmatprep.subr.mxu0 %v96
    %176 = vmatpush1.msra.mxu0 %v95
    %177 = vmatprep.subr.mxu0 %v94
    %178 = vmatpush1.msra.mxu0 %v93
    %179 = vmatprep.subr.mxu0 %v92
    %180 = vmatpush1.msra.mxu0 %v91
    %181 = vmatprep.subr.mxu0 %v90
    %182 = vmatpush1.msra.mxu0 %v89
    %183 = vmatprep.subr.mxu0 %v88
    %184 = vmatpush1.msra.mxu0 %v87
    %185 = vmatprep.subr.mxu0 %v86
    %186 = vmatpush1.msra.mxu0 %v85
    %187 = vmatprep.subr.mxu0 %v84
    %188 = vmatpush1.msra.mxu0 %v83
    %189 = vmatprep.subr.mxu0 0.0
    %190 = vmatpush2.msra.mxu0 0.0
    %191 = vmatprep.subr.mxu0 0.0
    %192 = vmatpush2.msra.mxu0 0.0
    %193 = vmatprep.subr.mxu0 0.0
    %194 = vmatpush2.msra.mxu0 0.0
    %195 = vmatprep.subr.mxu0 0.0
    %196 = vmatpush2.msra.mxu0 0.0
    %197 = vmatprep.subr.mxu0 0.0
    %198 = vmatpush2.msra.mxu0 0.0
    %199 = vmatprep.subr.mxu0 0.0
    %200 = vmatpush2.msra.mxu0 0.0
    %201 = vmatprep.subr.mxu0 0.0
    %202 = vmatpush2.msra.mxu0 0.0
    %203 = vmatprep.subr.mxu0 0.0
    %204 = vmatpush2.msra.mxu0 0.0
    %205 = vmatprep.subr.mxu0 0.0
    %206 = vmatpush2.msra.mxu0 0.0
    %207 = vmatprep.subr.mxu0 0.0
    %208 = vmatpush2.msra.mxu0 0.0
    %209 = vmatprep.subr.mxu0 0.0
    %210 = vmatpush2.msra.mxu0 0.0
    %211 = vmatprep.subr.mxu0 0.0
    %212 = vmatpush2.msra.mxu0 0.0
    %213 = vmatprep.subr.mxu0 0.0
    %214 = vmatpush2.msra.mxu0 0.0
    %215 = vmatprep.subr.mxu0 0.0
    %216 = vmatpush2.msra.mxu0 0.0
    %217 = vmatprep.subr.mxu0 0.0
    %218 = vmatpush2.msra.mxu0 0.0
    %219 = vmatprep.subr.mxu0 0.0
    %220 = vmatpush2.msra.mxu0 0.0
    %221 = vmatprep.mubr.f32.mxu0 0.0
    %222 = vmatmul.mubr.f32.gmra.mxu0 %v154
    %v223 = vpop.f32.mrf.mxu0
    %v224 = vadd.f32 0.0, %v223
    %v225 = vpop.f32.mrf.mxu0
    %v226 = vadd.f32 0.0, %v225
    %227 = vdwg.mxu0
    %v228 = vadd.f32 %v155, %v224
    %v229 = vadd.f32 %v156, %v226
    %230 = vmatprep.subr.mxu0 0.0
    %231 = vmatpush1.msra.mxu0 %v130
    %232 = vmatprep.subr.mxu0 0.0
    %233 = vmatpush1.msra.mxu0 %v129
    %234 = vmatprep.subr.mxu0 0.0
    %235 = vmatpush1.msra.mxu0 %v128
    %236 = vmatprep.subr.mxu0 0.0
    %237 = vmatpush1.msra.mxu0 %v127
    %238 = vmatprep.subr.mxu0 0.0
    %239 = vmatpush1.msra.mxu0 %v126
    %240 = vmatprep.subr.mxu0 0.0
    %241 = vmatpush1.msra.mxu0 %v125
    %242 = vmatprep.subr.mxu0 0.0
    %243 = vmatpush1.msra.mxu0 %v124
    %244 = vmatprep.subr.mxu0 0.0
    %245 = vmatpush1.msra.mxu0 %v123
    %246 = vmatprep.subr.mxu0 0.0
    %247 = vmatpush1.msra.mxu0 %v122
    %248 = vmatprep.subr.mxu0 0.0
    %249 = vmatpush1.msra.mxu0 %v121
    %250 = vmatprep.subr.mxu0 0.0
    %251 = vmatpush1.msra.mxu0 %v120
    %252 = vmatprep.subr.mxu0 0.0
    %253 = vmatpush1.msra.mxu0 %v119
    %254 = vmatprep.subr.mxu0 0.0
    %255 = vmatpush1.msra.mxu0 %v118
    %256 = vmatprep.subr.mxu0 0.0
    %257 = vmatpush1.msra.mxu0 %v117
    %258 = vmatprep.subr.mxu0 0.0
    %259 = vmatpush1.msra.mxu0 %v116
    %260 = vmatprep.subr.mxu0 0.0
    %261 = vmatpush1.msra.mxu0 %v115
    %262 = vmatprep.subr.mxu0 0.0
    %263 = vmatpush2.msra.mxu0 %v146
    %264 = vmatprep.subr.mxu0 0.0
    %265 = vmatpush2.msra.mxu0 %v145
    %266 = vmatprep.subr.mxu0 0.0
    %267 = vmatpush2.msra.mxu0 %v144
    %268 = vmatprep.subr.mxu0 0.0
    %269 = vmatpush2.msra.mxu0 %v143
    %270 = vmatprep.subr.mxu0 0.0
    %271 = vmatpush2.msra.mxu0 %v142
    %272 = vmatprep.subr.mxu0 0.0
    %273 = vmatpush2.msra.mxu0 %v141
    %274 = vmatprep.subr.mxu0 0.0
    %275 = vmatpush2.msra.mxu0 %v140
    %276 = vmatprep.subr.mxu0 0.0
    %277 = vmatpush2.msra.mxu0 %v139
    %278 = vmatprep.subr.mxu0 0.0
    %279 = vmatpush2.msra.mxu0 %v138
    %280 = vmatprep.subr.mxu0 0.0
    %281 = vmatpush2.msra.mxu0 %v137
    %282 = vmatprep.subr.mxu0 0.0
    %283 = vmatpush2.msra.mxu0 %v136
    %284 = vmatprep.subr.mxu0 0.0
    %285 = vmatpush2.msra.mxu0 %v135
    %286 = vmatprep.subr.mxu0 0.0
    %287 = vmatpush2.msra.mxu0 %v134
    %288 = vmatprep.subr.mxu0 0.0
    %289 = vmatpush2.msra.mxu0 %v133
    %290 = vmatprep.subr.mxu0 0.0
    %291 = vmatpush2.msra.mxu0 %v132
    %292 = vmatprep.subr.mxu0 0.0
    %293 = vmatpush2.msra.mxu0 %v131
    %294 = vmatprep.mubr.f32.mxu0 %v229
    %295 = vmatmul.mubr.f32.gmra.mxu0 %v228
    %v296 = vpop.f32.mrf.mxu0
    %v297 = vadd.f32 %v152, %v296
    %v298 = vpop.f32.mrf.mxu0
    %299 = vdwg.mxu0
    %300 = vmax.xlane.f32.xlu0 %v297
    %v301 = vpop.xlane.xlu0 %300
    %v302 = vsub.f32 %v297, %v301
    %v303 = vmul.f32 %v302, 1.442695
    %v304 = vpow.pop %v303
    %305 = vadd.xlane.f32.xlu0 %v304
    %v306 = vpop.xlane.xlu0 %305
    %v307 = vlog2.pop %v306
    %v308 = vmul.f32 %v307, 0.6931472
    %v309 = vsub.f32 %v302, %v308
    %310 = vst [vmem:[#allocation10] sm:$0xff] %v309
    %s311 = scalar_lea.vmem [#allocation2], 16
    %v312 = vld [vmem:[%s311] sm:$0xff]
    %v313 = vld [vmem:[%s311 + $0x8] sm:$0xff]
    %314 = vmatprep.subr.mxu0 %v114
    %315 = vmatpush1.msra.mxu0 %v113
    %316 = vmatprep.subr.mxu0 %v112
    %317 = vmatpush1.msra.mxu0 %v111
    %318 = vmatprep.subr.mxu0 %v110
    %319 = vmatpush1.msra.mxu0 %v109
    %320 = vmatprep.subr.mxu0 %v108
    %321 = vmatpush1.msra.mxu0 %v107
    %322 = vmatprep.subr.mxu0 %v106
    %323 = vmatpush1.msra.mxu0 %v105
    %324 = vmatprep.subr.mxu0 %v104
    %325 = vmatpush1.msra.mxu0 %v103
    %326 = vmatprep.subr.mxu0 %v102
    %327 = vmatpush1.msra.mxu0 %v101
    %328 = vmatprep.subr.mxu0 %v100
    %329 = vmatpush1.msra.mxu0 %v99
    %330 = vmatprep.subr.mxu0 %v98
    %331 = vmatpush1.msra.mxu0 %v97
    %332 = vmatprep.subr.mxu0 %v96
    %333 = vmatpush1.msra.mxu0 %v95
    %334 = vmatprep.subr.mxu0 %v94
    %335 = vmatpush1.msra.mxu0 %v93
    %336 = vmatprep.subr.mxu0 %v92
    %337 = vmatpush1.msra.mxu0 %v91
    %338 = vmatprep.subr.mxu0 %v90
    %339 = vmatpush1.msra.mxu0 %v89
    %340 = vmatprep.subr.mxu0 %v88
    %341 = vmatpush1.msra.mxu0 %v87
    %342 = vmatprep.subr.mxu0 %v86
    %343 = vmatpush1.msra.mxu0 %v85
    %344 = vmatprep.subr.mxu0 %v84
    %345 = vmatpush1.msra.mxu0 %v83
    %346 = vmatprep.subr.mxu0 0.0
    %347 = vmatpush2.msra.mxu0 0.0
    %348 = vmatprep.subr.mxu0 0.0
    %349 = vmatpush2.msra.mxu0 0.0
    %350 = vmatprep.subr.mxu0 0.0
    %351 = vmatpush2.msra.mxu0 0.0
    %352 = vmatprep.subr.mxu0 0.0
    %353 = vmatpush2.msra.mxu0 0.0
    %354 = vmatprep.subr.mxu0 0.0
    %355 = vmatpush2.msra.mxu0 0.0
    %356 = vmatprep.subr.mxu0 0.0
    %357 = vmatpush2.msra.mxu0 0.0
    %358 = vmatprep.subr.mxu0 0.0
    %359 = vmatpush2.msra.mxu0 0.0
    %360 = vmatprep.subr.mxu0 0.0
    %361 = vmatpush2.msra.mxu0 0.0
    %362 = vmatprep.subr.mxu0 0.0
    %363 = vmatpush2.msra.mxu0 0.0
    %364 = vmatprep.subr.mxu0 0.0
    %365 = vmatpush2.msra.mxu0 0.0
    %366 = vmatprep.subr.mxu0 0.0
    %367 = vmatpush2.msra.mxu0 0.0
    %368 = vmatprep.subr.mxu0 0.0
    %369 = vmatpush2.msra.mxu0 0.0
    %370 = vmatprep.subr.mxu0 0.0
    %371 = vmatpush2.msra.mxu0 0.0
    %372 = vmatprep.subr.mxu0 0.0
    %373 = vmatpush2.msra.mxu0 0.0
    %374 = vmatprep.subr.mxu0 0.0
    %375 = vmatpush2.msra.mxu0 0.0
    %376 = vmatprep.subr.mxu0 0.0
    %377 = vmatpush2.msra.mxu0 0.0
    %378 = vmatprep.mubr.f32.mxu0 0.0
    %379 = vmatmul.mubr.f32.gmra.mxu0 %v228
    %v380 = vpop.f32.mrf.mxu0
    %v381 = vadd.f32 0.0, %v380
    %v382 = vpop.f32.mrf.mxu0
    %v383 = vadd.f32 0.0, %v382
    %384 = vdwg.mxu0
    %v385 = vadd.f32 %v312, %v381
    %v386 = vadd.f32 %v313, %v383
    %387 = vmatprep.subr.mxu0 0.0
    %388 = vmatpush1.msra.mxu0 %v130
    %389 = vmatprep.subr.mxu0 0.0
    %390 = vmatpush1.msra.mxu0 %v129
    %391 = vmatprep.subr.mxu0 0.0
    %392 = vmatpush1.msra.mxu0 %v128
    %393 = vmatprep.subr.mxu0 0.0
    %394 = vmatpush1.msra.mxu0 %v127
    %395 = vmatprep.subr.mxu0 0.0
    %396 = vmatpush1.msra.mxu0 %v126
    %397 = vmatprep.subr.mxu0 0.0
    %398 = vmatpush1.msra.mxu0 %v125
    %399 = vmatprep.subr.mxu0 0.0
    %400 = vmatpush1.msra.mxu0 %v124
    %401 = vmatprep.subr.mxu0 0.0
    %402 = vmatpush1.msra.mxu0 %v123
    %403 = vmatprep.subr.mxu0 0.0
    %404 = vmatpush1.msra.mxu0 %v122
    %405 = vmatprep.subr.mxu0 0.0
    %406 = vmatpush1.msra.mxu0 %v121
    %407 = vmatprep.subr.mxu0 0.0
    %408 = vmatpush1.msra.mxu0 %v120
    %409 = vmatprep.subr.mxu0 0.0
    %410 = vmatpush1.msra.mxu0 %v119
    %411 = vmatprep.subr.mxu0 0.0
    %412 = vmatpush1.msra.mxu0 %v118
    %413 = vmatprep.subr.mxu0 0.0
    %414 = vmatpush1.msra.mxu0 %v117
    %415 = vmatprep.subr.mxu0 0.0
    %416 = vmatpush1.msra.mxu0 %v116
    %417 = vmatprep.subr.mxu0 0.0
    %418 = vmatpush1.msra.mxu0 %v115
    %419 = vmatprep.subr.mxu0 0.0
    %420 = vmatpush2.msra.mxu0 %v146
    %421 = vmatprep.subr.mxu0 0.0
    %422 = vmatpush2.msra.mxu0 %v145
    %423 = vmatprep.subr.mxu0 0.0
    %424 = vmatpush2.msra.mxu0 %v144
    %425 = vmatprep.subr.mxu0 0.0
    %426 = vmatpush2.msra.mxu0 %v143
    %427 = vmatprep.subr.mxu0 0.0
    %428 = vmatpush2.msra.mxu0 %v142
    %429 = vmatprep.subr.mxu0 0.0
    %430 = vmatpush2.msra.mxu0 %v141
    %431 = vmatprep.subr.mxu0 0.0
    %432 = vmatpush2.msra.mxu0 %v140
    %433 = vmatprep.subr.mxu0 0.0
    %434 = vmatpush2.msra.mxu0 %v139
    %435 = vmatprep.subr.mxu0 0.0
    %436 = vmatpush2.msra.mxu0 %v138
    %437 = vmatprep.subr.mxu0 0.0
    %438 = vmatpush2.msra.mxu0 %v137
    %439 = vmatprep.subr.mxu0 0.0
    %440 = vmatpush2.msra.mxu0 %v136
    %441 = vmatprep.subr.mxu0 0.0
    %442 = vmatpush2.msra.mxu0 %v135
    %443 = vmatprep.subr.mxu0 0.0
    %444 = vmatpush2.msra.mxu0 %v134
    %445 = vmatprep.subr.mxu0 0.0
    %446 = vmatpush2.msra.mxu0 %v133
    %447 = vmatprep.subr.mxu0 0.0
    %448 = vmatpush2.msra.mxu0 %v132
    %449 = vmatprep.subr.mxu0 0.0
    %450 = vmatpush2.msra.mxu0 %v131
    %451 = vmatprep.mubr.f32.mxu0 %v386
    %452 = vmatmul.mubr.f32.gmra.mxu0 %v385
    %v453 = vpop.f32.mrf.mxu0
    %v454 = vadd.f32 %v152, %v453
    %v455 = vpop.f32.mrf.mxu0
    %456 = vdwg.mxu0
    %457 = vmax.xlane.f32.xlu0 %v454
    %v458 = vpop.xlane.xlu0 %457
    %v459 = vsub.f32 %v454, %v458
    %v460 = vmul.f32 %v459, 1.442695
    %v461 = vpow.pop %v460
    %462 = vadd.xlane.f32.xlu0 %v461
    %v463 = vpop.xlane.xlu0 %462
    %v464 = vlog2.pop %v463
    %v465 = vmul.f32 %v464, 0.6931472
    %v466 = vsub.f32 %v459, %v465
    %s467 = scalar_lea.vmem [#allocation10], 8
    %468 = vst [vmem:[%s467] sm:$0xff] %v466
    %s469 = scalar_lea.vmem [#allocation2], 32
    %v470 = vld [vmem:[%s469] sm:$0xff]
    %v471 = vld [vmem:[%s469 + $0x8] sm:$0xff]
    %472 = vmatprep.subr.mxu0 %v114
    %473 = vmatpush1.msra.mxu0 %v113
    %474 = vmatprep.subr.mxu0 %v112
    %475 = vmatpush1.msra.mxu0 %v111
    %476 = vmatprep.subr.mxu0 %v110
    %477 = vmatpush1.msra.mxu0 %v109
    %478 = vmatprep.subr.mxu0 %v108
    %479 = vmatpush1.msra.mxu0 %v107
    %480 = vmatprep.subr.mxu0 %v106
    %481 = vmatpush1.msra.mxu0 %v105
    %482 = vmatprep.subr.mxu0 %v104
    %483 = vmatpush1.msra.mxu0 %v103
    %484 = vmatprep.subr.mxu0 %v102
    %485 = vmatpush1.msra.mxu0 %v101
    %486 = vmatprep.subr.mxu0 %v100
    %487 = vmatpush1.msra.mxu0 %v99
    %488 = vmatprep.subr.mxu0 %v98
    %489 = vmatpush1.msra.mxu0 %v97
    %490 = vmatprep.subr.mxu0 %v96
    %491 = vmatpush1.msra.mxu0 %v95
    %492 = vmatprep.subr.mxu0 %v94
    %493 = vmatpush1.msra.mxu0 %v93
    %494 = vmatprep.subr.mxu0 %v92
    %495 = vmatpush1.msra.mxu0 %v91
    %496 = vmatprep.subr.mxu0 %v90
    %497 = vmatpush1.msra.mxu0 %v89
    %498 = vmatprep.subr.mxu0 %v88
    %499 = vmatpush1.msra.mxu0 %v87
    %500 = vmatprep.subr.mxu0 %v86
    %501 = vmatpush1.msra.mxu0 %v85
    %502 = vmatprep.subr.mxu0 %v84
    %503 = vmatpush1.msra.mxu0 %v83
    %504 = vmatprep.subr.mxu0 0.0
    %505 = vmatpush2.msra.mxu0 0.0
    %506 = vmatprep.subr.mxu0 0.0
    %507 = vmatpush2.msra.mxu0 0.0
    %508 = vmatprep.subr.mxu0 0.0
    %509 = vmatpush2.msra.mxu0 0.0
    %510 = vmatprep.subr.mxu0 0.0
    %511 = vmatpush2.msra.mxu0 0.0
    %512 = vmatprep.subr.mxu0 0.0
    %513 = vmatpush2.msra.mxu0 0.0
    %514 = vmatprep.subr.mxu0 0.0
    %515 = vmatpush2.msra.mxu0 0.0
    %516 = vmatprep.subr.mxu0 0.0
    %517 = vmatpush2.msra.mxu0 0.0
    %518 = vmatprep.subr.mxu0 0.0
    %519 = vmatpush2.msra.mxu0 0.0
    %520 = vmatprep.subr.mxu0 0.0
    %521 = vmatpush2.msra.mxu0 0.0
    %522 = vmatprep.subr.mxu0 0.0
    %523 = vmatpush2.msra.mxu0 0.0
    %524 = vmatprep.subr.mxu0 0.0
    %525 = vmatpush2.msra.mxu0 0.0
    %526 = vmatprep.subr.mxu0 0.0
    %527 = vmatpush2.msra.mxu0 0.0
    %528 = vmatprep.subr.mxu0 0.0
    %529 = vmatpush2.msra.mxu0 0.0
    %530 = vmatprep.subr.mxu0 0.0
    %531 = vmatpush2.msra.mxu0 0.0
    %532 = vmatprep.subr.mxu0 0.0
    %533 = vmatpush2.msra.mxu0 0.0
    %534 = vmatprep.subr.mxu0 0.0
    %535 = vmatpush2.msra.mxu0 0.0
    %536 = vmatprep.mubr.f32.mxu0 0.0
    %537 = vmatmul.mubr.f32.gmra.mxu0 %v385
    %v538 = vpop.f32.mrf.mxu0
    %v539 = vadd.f32 0.0, %v538
    %v540 = vpop.f32.mrf.mxu0
    %v541 = vadd.f32 0.0, %v540
    %542 = vdwg.mxu0
    %v543 = vadd.f32 %v470, %v539
    %v544 = vadd.f32 %v471, %v541
    %545 = vmatprep.subr.mxu0 0.0
    %546 = vmatpush1.msra.mxu0 %v130
    %547 = vmatprep.subr.mxu0 0.0
    %548 = vmatpush1.msra.mxu0 %v129
    %549 = vmatprep.subr.mxu0 0.0
    %550 = vmatpush1.msra.mxu0 %v128
    %551 = vmatprep.subr.mxu0 0.0
    %552 = vmatpush1.msra.mxu0 %v127
    %553 = vmatprep.subr.mxu0 0.0
    %554 = vmatpush1.msra.mxu0 %v126
    %555 = vmatprep.subr.mxu0 0.0
    %556 = vmatpush1.msra.mxu0 %v125
    %557 = vmatprep.subr.mxu0 0.0
    %558 = vmatpush1.msra.mxu0 %v124
    %559 = vmatprep.subr.mxu0 0.0
    %560 = vmatpush1.msra.mxu0 %v123
    %561 = vmatprep.subr.mxu0 0.0
    %562 = vmatpush1.msra.mxu0 %v122
    %563 = vmatprep.subr.mxu0 0.0
    %564 = vmatpush1.msra.mxu0 %v121
    %565 = vmatprep.subr.mxu0 0.0
    %566 = vmatpush1.msra.mxu0 %v120
    %567 = vmatprep.subr.mxu0 0.0
    %568 = vmatpush1.msra.mxu0 %v119
    %569 = vmatprep.subr.mxu0 0.0
    %570 = vmatpush1.msra.mxu0 %v118
    %571 = vmatprep.subr.mxu0 0.0
    %572 = vmatpush1.msra.mxu0 %v117
    %573 = vmatprep.subr.mxu0 0.0
    %574 = vmatpush1.msra.mxu0 %v116
    %575 = vmatprep.subr.mxu0 0.0
    %576 = vmatpush1.msra.mxu0 %v115
    %577 = vmatprep.subr.mxu0 0.0
    %578 = vmatpush2.msra.mxu0 %v146
    %579 = vmatprep.subr.mxu0 0.0
    %580 = vmatpush2.msra.mxu0 %v145
    %581 = vmatprep.subr.mxu0 0.0
    %582 = vmatpush2.msra.mxu0 %v144
    %583 = vmatprep.subr.mxu0 0.0
    %584 = vmatpush2.msra.mxu0 %v143
    %585 = vmatprep.subr.mxu0 0.0
    %586 = vmatpush2.msra.mxu0 %v142
    %587 = vmatprep.subr.mxu0 0.0
    %588 = vmatpush2.msra.mxu0 %v141
    %589 = vmatprep.subr.mxu0 0.0
    %590 = vmatpush2.msra.mxu0 %v140
    %591 = vmatprep.subr.mxu0 0.0
    %592 = vmatpush2.msra.mxu0 %v139
    %593 = vmatprep.subr.mxu0 0.0
    %594 = vmatpush2.msra.mxu0 %v138
    %595 = vmatprep.subr.mxu0 0.0
    %596 = vmatpush2.msra.mxu0 %v137
    %597 = vmatprep.subr.mxu0 0.0
    %598 = vmatpush2.msra.mxu0 %v136
    %599 = vmatprep.subr.mxu0 0.0
    %600 = vmatpush2.msra.mxu0 %v135
    %601 = vmatprep.subr.mxu0 0.0
    %602 = vmatpush2.msra.mxu0 %v134
    %603 = vmatprep.subr.mxu0 0.0
    %604 = vmatpush2.msra.mxu0 %v133
    %605 = vmatprep.subr.mxu0 0.0
    %606 = vmatpush2.msra.mxu0 %v132
    %607 = vmatprep.subr.mxu0 0.0
    %608 = vmatpush2.msra.mxu0 %v131
    %609 = vmatprep.mubr.f32.mxu0 %v544
    %610 = vmatmul.mubr.f32.gmra.mxu0 %v543
    %v611 = vpop.f32.mrf.mxu0
    %v612 = vadd.f32 %v152, %v611
    %v613 = vpop.f32.mrf.mxu0
    %614 = vdwg.mxu0
    %615 = vmax.xlane.f32.xlu0 %v612
    %v616 = vpop.xlane.xlu0 %615
    %v617 = vsub.f32 %v612, %v616
    %v618 = vmul.f32 %v617, 1.442695
    %v619 = vpow.pop %v618
    %620 = vadd.xlane.f32.xlu0 %v619
    %v621 = vpop.xlane.xlu0 %620
    %v622 = vlog2.pop %v621
    %v623 = vmul.f32 %v622, 0.6931472
    %v624 = vsub.f32 %v617, %v623
    %s625 = scalar_lea.vmem [#allocation10], 16
    %626 = vst [vmem:[%s625] sm:$0xff] %v624
    %s627 = scalar_lea.vmem [#allocation2], 48
    %v628 = vld [vmem:[%s627] sm:$0xff]
    %v629 = vld [vmem:[%s627 + $0x8] sm:$0xff]
    %630 = vmatprep.subr.mxu0 %v114
    %631 = vmatpush1.msra.mxu0 %v113
    %632 = vmatprep.subr.mxu0 %v112
    %633 = vmatpush1.msra.mxu0 %v111
    %634 = vmatprep.subr.mxu0 %v110
    %635 = vmatpush1.msra.mxu0 %v109
    %636 = vmatprep.subr.mxu0 %v108
    %637 = vmatpush1.msra.mxu0 %v107
    %638 = vmatprep.subr.mxu0 %v106
    %639 = vmatpush1.msra.mxu0 %v105
    %640 = vmatprep.subr.mxu0 %v104
    %641 = vmatpush1.msra.mxu0 %v103
    %642 = vmatprep.subr.mxu0 %v102
    %643 = vmatpush1.msra.mxu0 %v101
    %644 = vmatprep.subr.mxu0 %v100
    %645 = vmatpush1.msra.mxu0 %v99
    %646 = vmatprep.subr.mxu0 %v98
    %647 = vmatpush1.msra.mxu0 %v97
    %648 = vmatprep.subr.mxu0 %v96
    %649 = vmatpush1.msra.mxu0 %v95
    %650 = vmatprep.subr.mxu0 %v94
    %651 = vmatpush1.msra.mxu0 %v93
    %652 = vmatprep.subr.mxu0 %v92
    %653 = vmatpush1.msra.mxu0 %v91
    %654 = vmatprep.subr.mxu0 %v90
    %655 = vmatpush1.msra.mxu0 %v89
    %656 = vmatprep.subr.mxu0 %v88
    %657 = vmatpush1.msra.mxu0 %v87
    %658 = vmatprep.subr.mxu0 %v86
    %659 = vmatpush1.msra.mxu0 %v85
    %660 = vmatprep.subr.mxu0 %v84
    %661 = vmatpush1.msra.mxu0 %v83
    %662 = vmatprep.subr.mxu0 0.0
    %663 = vmatpush2.msra.mxu0 0.0
    %664 = vmatprep.subr.mxu0 0.0
    %665 = vmatpush2.msra.mxu0 0.0
    %666 = vmatprep.subr.mxu0 0.0
    %667 = vmatpush2.msra.mxu0 0.0
    %668 = vmatprep.subr.mxu0 0.0
    %669 = vmatpush2.msra.mxu0 0.0
    %670 = vmatprep.subr.mxu0 0.0
    %671 = vmatpush2.msra.mxu0 0.0
    %672 = vmatprep.subr.mxu0 0.0
    %673 = vmatpush2.msra.mxu0 0.0
    %674 = vmatprep.subr.mxu0 0.0
    %675 = vmatpush2.msra.mxu0 0.0
    %676 = vmatprep.subr.mxu0 0.0
    %677 = vmatpush2.msra.mxu0 0.0
    %678 = vmatprep.subr.mxu0 0.0
    %679 = vmatpush2.msra.mxu0 0.0
    %680 = vmatprep.subr.mxu0 0.0
    %681 = vmatpush2.msra.mxu0 0.0
    %682 = vmatprep.subr.mxu0 0.0
    %683 = vmatpush2.msra.mxu0 0.0
    %684 = vmatprep.subr.mxu0 0.0
    %685 = vmatpush2.msra.mxu0 0.0
    %686 = vmatprep.subr.mxu0 0.0
    %687 = vmatpush2.msra.mxu0 0.0
    %688 = vmatprep.subr.mxu0 0.0
    %689 = vmatpush2.msra.mxu0 0.0
    %690 = vmatprep.subr.mxu0 0.0
    %691 = vmatpush2.msra.mxu0 0.0
    %692 = vmatprep.subr.mxu0 0.0
    %693 = vmatpush2.msra.mxu0 0.0
    %694 = vmatprep.mubr.f32.mxu0 0.0
    %695 = vmatmul.mubr.f32.gmra.mxu0 %v543
    %v696 = vpop.f32.mrf.mxu0
    %v697 = vadd.f32 0.0, %v696
    %v698 = vpop.f32.mrf.mxu0
    %v699 = vadd.f32 0.0, %v698
    %700 = vdwg.mxu0
    %v701 = vadd.f32 %v628, %v697
    %v702 = vadd.f32 %v629, %v699
    %703 = vmatprep.subr.mxu0 0.0
    %704 = vmatpush1.msra.mxu0 %v130
    %705 = vmatprep.subr.mxu0 0.0
    %706 = vmatpush1.msra.mxu0 %v129
    %707 = vmatprep.subr.mxu0 0.0
    %708 = vmatpush1.msra.mxu0 %v128
    %709 = vmatprep.subr.mxu0 0.0
    %710 = vmatpush1.msra.mxu0 %v127
    %711 = vmatprep.subr.mxu0 0.0
    %712 = vmatpush1.msra.mxu0 %v126
    %713 = vmatprep.subr.mxu0 0.0
    %714 = vmatpush1.msra.mxu0 %v125
    %715 = vmatprep.subr.mxu0 0.0
    %716 = vmatpush1.msra.mxu0 %v124
    %717 = vmatprep.subr.mxu0 0.0
    %718 = vmatpush1.msra.mxu0 %v123
    %719 = vmatprep.subr.mxu0 0.0
    %720 = vmatpush1.msra.mxu0 %v122
    %721 = vmatprep.subr.mxu0 0.0
    %722 = vmatpush1.msra.mxu0 %v121
    %723 = vmatprep.subr.mxu0 0.0
    %724 = vmatpush1.msra.mxu0 %v120
    %725 = vmatprep.subr.mxu0 0.0
    %726 = vmatpush1.msra.mxu0 %v119
    %727 = vmatprep.subr.mxu0 0.0
    %728 = vmatpush1.msra.mxu0 %v118
    %729 = vmatprep.subr.mxu0 0.0
    %730 = vmatpush1.msra.mxu0 %v117
    %731 = vmatprep.subr.mxu0 0.0
    %732 = vmatpush1.msra.mxu0 %v116
    %733 = vmatprep.subr.mxu0 0.0
    %734 = vmatpush1.msra.mxu0 %v115
    %735 = vmatprep.subr.mxu0 0.0
    %736 = vmatpush2.msra.mxu0 %v146
    %737 = vmatprep.subr.mxu0 0.0
    %738 = vmatpush2.msra.mxu0 %v145
    %739 = vmatprep.subr.mxu0 0.0
    %740 = vmatpush2.msra.mxu0 %v144
    %741 = vmatprep.subr.mxu0 0.0
    %742 = vmatpush2.msra.mxu0 %v143
    %743 = vmatprep.subr.mxu0 0.0
    %744 = vmatpush2.msra.mxu0 %v142
    %745 = vmatprep.subr.mxu0 0.0
    %746 = vmatpush2.msra.mxu0 %v141
    %747 = vmatprep.subr.mxu0 0.0
    %748 = vmatpush2.msra.mxu0 %v140
    %749 = vmatprep.subr.mxu0 0.0
    %750 = vmatpush2.msra.mxu0 %v139
    %751 = vmatprep.subr.mxu0 0.0
    %752 = vmatpush2.msra.mxu0 %v138
    %753 = vmatprep.subr.mxu0 0.0
    %754 = vmatpush2.msra.mxu0 %v137
    %755 = vmatprep.subr.mxu0 0.0
    %756 = vmatpush2.msra.mxu0 %v136
    %757 = vmatprep.subr.mxu0 0.0
    %758 = vmatpush2.msra.mxu0 %v135
    %759 = vmatprep.subr.mxu0 0.0
    %760 = vmatpush2.msra.mxu0 %v134
    %761 = vmatprep.subr.mxu0 0.0
    %762 = vmatpush2.msra.mxu0 %v133
    %763 = vmatprep.subr.mxu0 0.0
    %764 = vmatpush2.msra.mxu0 %v132
    %765 = vmatprep.subr.mxu0 0.0
    %766 = vmatpush2.msra.mxu0 %v131
    %767 = vmatprep.mubr.f32.mxu0 %v702
    %768 = vmatmul.mubr.f32.gmra.mxu0 %v701
    %v769 = vpop.f32.mrf.mxu0
    %v770 = vadd.f32 %v152, %v769
    %v771 = vpop.f32.mrf.mxu0
    %772 = vdwg.mxu0
    %773 = vmax.xlane.f32.xlu0 %v770
    %v774 = vpop.xlane.xlu0 %773
    %v775 = vsub.f32 %v770, %v774
    %v776 = vmul.f32 %v775, 1.442695
    %v777 = vpow.pop %v776
    %778 = vadd.xlane.f32.xlu0 %v777
    %v779 = vpop.xlane.xlu0 %778
    %v780 = vlog2.pop %v779
    %v781 = vmul.f32 %v780, 0.6931472
    %v782 = vsub.f32 %v775, %v781
    %s783 = scalar_lea.vmem [#allocation10], 24
    %784 = vst [vmem:[%s783] sm:$0xff] %v782
    %s785 = scalar_lea.vmem [#allocation2], 64
    %v786 = vld [vmem:[%s785] sm:$0xff]
    %v787 = vld [vmem:[%s785 + $0x8] sm:$0xff]
    %788 = vmatprep.subr.mxu0 %v114
    %789 = vmatpush1.msra.mxu0 %v113
    %790 = vmatprep.subr.mxu0 %v112
    %791 = vmatpush1.msra.mxu0 %v111
    %792 = vmatprep.subr.mxu0 %v110
    %793 = vmatpush1.msra.mxu0 %v109
    %794 = vmatprep.subr.mxu0 %v108
    %795 = vmatpush1.msra.mxu0 %v107
    %796 = vmatprep.subr.mxu0 %v106
    %797 = vmatpush1.msra.mxu0 %v105
    %798 = vmatprep.subr.mxu0 %v104
    %799 = vmatpush1.msra.mxu0 %v103
    %800 = vmatprep.subr.mxu0 %v102
    %801 = vmatpush1.msra.mxu0 %v101
    %802 = vmatprep.subr.mxu0 %v100
    %803 = vmatpush1.msra.mxu0 %v99
    %804 = vmatprep.subr.mxu0 %v98
    %805 = vmatpush1.msra.mxu0 %v97
    %806 = vmatprep.subr.mxu0 %v96
    %807 = vmatpush1.msra.mxu0 %v95
    %808 = vmatprep.subr.mxu0 %v94
    %809 = vmatpush1.msra.mxu0 %v93
    %810 = vmatprep.subr.mxu0 %v92
    %811 = vmatpush1.msra.mxu0 %v91
    %812 = vmatprep.subr.mxu0 %v90
    %813 = vmatpush1.msra.mxu0 %v89
    %814 = vmatprep.subr.mxu0 %v88
    %815 = vmatpush1.msra.mxu0 %v87
    %816 = vmatprep.subr.mxu0 %v86
    %817 = vmatpush1.msra.mxu0 %v85
    %818 = vmatprep.subr.mxu0 %v84
    %819 = vmatpush1.msra.mxu0 %v83
    %820 = vmatprep.subr.mxu0 0.0
    %821 = vmatpush2.msra.mxu0 0.0
    %822 = vmatprep.subr.mxu0 0.0
    %823 = vmatpush2.msra.mxu0 0.0
    %824 = vmatprep.subr.mxu0 0.0
    %825 = vmatpush2.msra.mxu0 0.0
    %826 = vmatprep.subr.mxu0 0.0
    %827 = vmatpush2.msra.mxu0 0.0
    %828 = vmatprep.subr.mxu0 0.0
    %829 = vmatpush2.msra.mxu0 0.0
    %830 = vmatprep.subr.mxu0 0.0
    %831 = vmatpush2.msra.mxu0 0.0
    %832 = vmatprep.subr.mxu0 0.0
    %833 = vmatpush2.msra.mxu0 0.0
    %834 = vmatprep.subr.mxu0 0.0
    %835 = vmatpush2.msra.mxu0 0.0
    %836 = vmatprep.subr.mxu0 0.0
    %837 = vmatpush2.msra.mxu0 0.0
    %838 = vmatprep.subr.mxu0 0.0
    %839 = vmatpush2.msra.mxu0 0.0
    %840 = vmatprep.subr.mxu0 0.0
    %841 = vmatpush2.msra.mxu0 0.0
    %842 = vmatprep.subr.mxu0 0.0
    %843 = vmatpush2.msra.mxu0 0.0
    %844 = vmatprep.subr.mxu0 0.0
    %845 = vmatpush2.msra.mxu0 0.0
    %846 = vmatprep.subr.mxu0 0.0
    %847 = vmatpush2.msra.mxu0 0.0
    %848 = vmatprep.subr.mxu0 0.0
    %849 = vmatpush2.msra.mxu0 0.0
    %850 = vmatprep.subr.mxu0 0.0
    %851 = vmatpush2.msra.mxu0 0.0
    %852 = vmatprep.mubr.f32.mxu0 0.0
    %853 = vmatmul.mubr.f32.gmra.mxu0 %v701
    %v854 = vpop.f32.mrf.mxu0
    %v855 = vadd.f32 0.0, %v854
    %v856 = vpop.f32.mrf.mxu0
    %v857 = vadd.f32 0.0, %v856
    %858 = vdwg.mxu0
    %v859 = vadd.f32 %v786, %v855
    %v860 = vadd.f32 %v787, %v857
    %861 = vmatprep.subr.mxu0 0.0
    %862 = vmatpush1.msra.mxu0 %v130
    %863 = vmatprep.subr.mxu0 0.0
    %864 = vmatpush1.msra.mxu0 %v129
    %865 = vmatprep.subr.mxu0 0.0
    %866 = vmatpush1.msra.mxu0 %v128
    %867 = vmatprep.subr.mxu0 0.0
    %868 = vmatpush1.msra.mxu0 %v127
    %869 = vmatprep.subr.mxu0 0.0
    %870 = vmatpush1.msra.mxu0 %v126
    %871 = vmatprep.subr.mxu0 0.0
    %872 = vmatpush1.msra.mxu0 %v125
    %873 = vmatprep.subr.mxu0 0.0
    %874 = vmatpush1.msra.mxu0 %v124
    %875 = vmatprep.subr.mxu0 0.0
    %876 = vmatpush1.msra.mxu0 %v123
    %877 = vmatprep.subr.mxu0 0.0
    %878 = vmatpush1.msra.mxu0 %v122
    %879 = vmatprep.subr.mxu0 0.0
    %880 = vmatpush1.msra.mxu0 %v121
    %881 = vmatprep.subr.mxu0 0.0
    %882 = vmatpush1.msra.mxu0 %v120
    %883 = vmatprep.subr.mxu0 0.0
    %884 = vmatpush1.msra.mxu0 %v119
    %885 = vmatprep.subr.mxu0 0.0
    %886 = vmatpush1.msra.mxu0 %v118
    %887 = vmatprep.subr.mxu0 0.0
    %888 = vmatpush1.msra.mxu0 %v117
    %889 = vmatprep.subr.mxu0 0.0
    %890 = vmatpush1.msra.mxu0 %v116
    %891 = vmatprep.subr.mxu0 0.0
    %892 = vmatpush1.msra.mxu0 %v115
    %893 = vmatprep.subr.mxu0 0.0
    %894 = vmatpush2.msra.mxu0 %v146
    %895 = vmatprep.subr.mxu0 0.0
    %896 = vmatpush2.msra.mxu0 %v145
    %897 = vmatprep.subr.mxu0 0.0
    %898 = vmatpush2.msra.mxu0 %v144
    %899 = vmatprep.subr.mxu0 0.0
    %900 = vmatpush2.msra.mxu0 %v143
    %901 = vmatprep.subr.mxu0 0.0
    %902 = vmatpush2.msra.mxu0 %v142
    %903 = vmatprep.subr.mxu0 0.0
    %904 = vmatpush2.msra.mxu0 %v141
    %905 = vmatprep.subr.mxu0 0.0
    %906 = vmatpush2.msra.mxu0 %v140
    %907 = vmatprep.subr.mxu0 0.0
    %908 = vmatpush2.msra.mxu0 %v139
    %909 = vmatprep.subr.mxu0 0.0
    %910 = vmatpush2.msra.mxu0 %v138
    %911 = vmatprep.subr.mxu0 0.0
    %912 = vmatpush2.msra.mxu0 %v137
    %913 = vmatprep.subr.mxu0 0.0
    %914 = vmatpush2.msra.mxu0 %v136
    %915 = vmatprep.subr.mxu0 0.0
    %916 = vmatpush2.msra.mxu0 %v135
    %917 = vmatprep.subr.mxu0 0.0
    %918 = vmatpush2.msra.mxu0 %v134
    %919 = vmatprep.subr.mxu0 0.0
    %920 = vmatpush2.msra.mxu0 %v133
    %921 = vmatprep.subr.mxu0 0.0
    %922 = vmatpush2.msra.mxu0 %v132
    %923 = vmatprep.subr.mxu0 0.0
    %924 = vmatpush2.msra.mxu0 %v131
    %925 = vmatprep.mubr.f32.mxu0 %v860
    %926 = vmatmul.mubr.f32.gmra.mxu0 %v859
    %v927 = vpop.f32.mrf.mxu0
    %v928 = vadd.f32 %v152, %v927
    %v929 = vpop.f32.mrf.mxu0
    %930 = vdwg.mxu0
    %931 = vmax.xlane.f32.xlu0 %v928
    %v932 = vpop.xlane.xlu0 %931
    %v933 = vsub.f32 %v928, %v932
    %v934 = vmul.f32 %v933, 1.442695
    %v935 = vpow.pop %v934
    %936 = vadd.xlane.f32.xlu0 %v935
    %v937 = vpop.xlane.xlu0 %936
    %v938 = vlog2.pop %v937
    %v939 = vmul.f32 %v938, 0.6931472
    %v940 = vsub.f32 %v933, %v939
    %s941 = scalar_lea.vmem [#allocation10], 32
    %942 = vst [vmem:[%s941] sm:$0xff] %v940
    %s943 = scalar_lea.vmem [#allocation2], 80
    %v944 = vld [vmem:[%s943] sm:$0xff]
    %v945 = vld [vmem:[%s943 + $0x8] sm:$0xff]
    %946 = vmatprep.subr.mxu0 %v114
    %947 = vmatpush1.msra.mxu0 %v113
    %948 = vmatprep.subr.mxu0 %v112
    %949 = vmatpush1.msra.mxu0 %v111
    %950 = vmatprep.subr.mxu0 %v110
    %951 = vmatpush1.msra.mxu0 %v109
    %952 = vmatprep.subr.mxu0 %v108
    %953 = vmatpush1.msra.mxu0 %v107
    %954 = vmatprep.subr.mxu0 %v106
    %955 = vmatpush1.msra.mxu0 %v105
    %956 = vmatprep.subr.mxu0 %v104
    %957 = vmatpush1.msra.mxu0 %v103
    %958 = vmatprep.subr.mxu0 %v102
    %959 = vmatpush1.msra.mxu0 %v101
    %960 = vmatprep.subr.mxu0 %v100
    %961 = vmatpush1.msra.mxu0 %v99
    %962 = vmatprep.subr.mxu0 %v98
    %963 = vmatpush1.msra.mxu0 %v97
    %964 = vmatprep.subr.mxu0 %v96
    %965 = vmatpush1.msra.mxu0 %v95
    %966 = vmatprep.subr.mxu0 %v94
    %967 = vmatpush1.msra.mxu0 %v93
    %968 = vmatprep.subr.mxu0 %v92
    %969 = vmatpush1.msra.mxu0 %v91
    %970 = vmatprep.subr.mxu0 %v90
    %971 = vmatpush1.msra.mxu0 %v89
    %972 = vmatprep.subr.mxu0 %v88
    %973 = vmatpush1.msra.mxu0 %v87
    %974 = vmatprep.subr.mxu0 %v86
    %975 = vmatpush1.msra.mxu0 %v85
    %976 = vmatprep.subr.mxu0 %v84
    %977 = vmatpush1.msra.mxu0 %v83
    %978 = vmatprep.subr.mxu0 0.0
    %979 = vmatpush2.msra.mxu0 0.0
    %980 = vmatprep.subr.mxu0 0.0
    %981 = vmatpush2.msra.mxu0 0.0
    %982 = vmatprep.subr.mxu0 0.0
    %983 = vmatpush2.msra.mxu0 0.0
    %984 = vmatprep.subr.mxu0 0.0
    %985 = vmatpush2.msra.mxu0 0.0
    %986 = vmatprep.subr.mxu0 0.0
    %987 = vmatpush2.msra.mxu0 0.0
    %988 = vmatprep.subr.mxu0 0.0
    %989 = vmatpush2.msra.mxu0 0.0
    %990 = vmatprep.subr.mxu0 0.0
    %991 = vmatpush2.msra.mxu0 0.0
    %992 = vmatprep.subr.mxu0 0.0
    %993 = vmatpush2.msra.mxu0 0.0
    %994 = vmatprep.subr.mxu0 0.0
    %995 = vmatpush2.msra.mxu0 0.0
    %996 = vmatprep.subr.mxu0 0.0
    %997 = vmatpush2.msra.mxu0 0.0
    %998 = vmatprep.subr.mxu0 0.0
    %999 = vmatpush2.msra.mxu0 0.0
    %1000 = vmatprep.subr.mxu0 0.0
    %1001 = vmatpush2.msra.mxu0 0.0
    %1002 = vmatprep.subr.mxu0 0.0
    %1003 = vmatpush2.msra.mxu0 0.0
    %1004 = vmatprep.subr.mxu0 0.0
    %1005 = vmatpush2.msra.mxu0 0.0
    %1006 = vmatprep.subr.mxu0 0.0
    %1007 = vmatpush2.msra.mxu0 0.0
    %1008 = vmatprep.subr.mxu0 0.0
    %1009 = vmatpush2.msra.mxu0 0.0
    %1010 = vmatprep.mubr.f32.mxu0 0.0
    %1011 = vmatmul.mubr.f32.gmra.mxu0 %v859
    %v1012 = vpop.f32.mrf.mxu0
    %v1013 = vadd.f32 0.0, %v1012
    %v1014 = vpop.f32.mrf.mxu0
    %v1015 = vadd.f32 0.0, %v1014
    %1016 = vdwg.mxu0
    %v1017 = vadd.f32 %v944, %v1013
    %v1018 = vadd.f32 %v945, %v1015
    %1019 = vmatprep.subr.mxu0 0.0
    %1020 = vmatpush1.msra.mxu0 %v130
    %1021 = vmatprep.subr.mxu0 0.0
    %1022 = vmatpush1.msra.mxu0 %v129
    %1023 = vmatprep.subr.mxu0 0.0
    %1024 = vmatpush1.msra.mxu0 %v128
    %1025 = vmatprep.subr.mxu0 0.0
    %1026 = vmatpush1.msra.mxu0 %v127
    %1027 = vmatprep.subr.mxu0 0.0
    %1028 = vmatpush1.msra.mxu0 %v126
    %1029 = vmatprep.subr.mxu0 0.0
    %1030 = vmatpush1.msra.mxu0 %v125
    %1031 = vmatprep.subr.mxu0 0.0
    %1032 = vmatpush1.msra.mxu0 %v124
    %1033 = vmatprep.subr.mxu0 0.0
    %1034 = vmatpush1.msra.mxu0 %v123
    %1035 = vmatprep.subr.mxu0 0.0
    %1036 = vmatpush1.msra.mxu0 %v122
    %1037 = vmatprep.subr.mxu0 0.0
    %1038 = vmatpush1.msra.mxu0 %v121
    %1039 = vmatprep.subr.mxu0 0.0
    %1040 = vmatpush1.msra.mxu0 %v120
    %1041 = vmatprep.subr.mxu0 0.0
    %1042 = vmatpush1.msra.mxu0 %v119
    %1043 = vmatprep.subr.mxu0 0.0
    %1044 = vmatpush1.msra.mxu0 %v118
    %1045 = vmatprep.subr.mxu0 0.0
    %1046 = vmatpush1.msra.mxu0 %v117
    %1047 = vmatprep.subr.mxu0 0.0
    %1048 = vmatpush1.msra.mxu0 %v116
    %1049 = vmatprep.subr.mxu0 0.0
    %1050 = vmatpush1.msra.mxu0 %v115
    %1051 = vmatprep.subr.mxu0 0.0
    %1052 = vmatpush2.msra.mxu0 %v146
    %1053 = vmatprep.subr.mxu0 0.0
    %1054 = vmatpush2.msra.mxu0 %v145
    %1055 = vmatprep.subr.mxu0 0.0
    %1056 = vmatpush2.msra.mxu0 %v144
    %1057 = vmatprep.subr.mxu0 0.0
    %1058 = vmatpush2.msra.mxu0 %v143
    %1059 = vmatprep.subr.mxu0 0.0
    %1060 = vmatpush2.msra.mxu0 %v142
    %1061 = vmatprep.subr.mxu0 0.0
    %1062 = vmatpush2.msra.mxu0 %v141
    %1063 = vmatprep.subr.mxu0 0.0
    %1064 = vmatpush2.msra.mxu0 %v140
    %1065 = vmatprep.subr.mxu0 0.0
    %1066 = vmatpush2.msra.mxu0 %v139
    %1067 = vmatprep.subr.mxu0 0.0
    %1068 = vmatpush2.msra.mxu0 %v138
    %1069 = vmatprep.subr.mxu0 0.0
    %1070 = vmatpush2.msra.mxu0 %v137
    %1071 = vmatprep.subr.mxu0 0.0
    %1072 = vmatpush2.msra.mxu0 %v136
    %1073 = vmatprep.subr.mxu0 0.0
    %1074 = vmatpush2.msra.mxu0 %v135
    %1075 = vmatprep.subr.mxu0 0.0
    %1076 = vmatpush2.msra.mxu0 %v134
    %1077 = vmatprep.subr.mxu0 0.0
    %1078 = vmatpush2.msra.mxu0 %v133
    %1079 = vmatprep.subr.mxu0 0.0
    %1080 = vmatpush2.msra.mxu0 %v132
    %1081 = vmatprep.subr.mxu0 0.0
    %1082 = vmatpush2.msra.mxu0 %v131
    %1083 = vmatprep.mubr.f32.mxu0 %v1018
    %1084 = vmatmul.mubr.f32.gmra.mxu0 %v1017
    %v1085 = vpop.f32.mrf.mxu0
    %v1086 = vadd.f32 %v152, %v1085
    %v1087 = vpop.f32.mrf.mxu0
    %1088 = vdwg.mxu0
    %1089 = vmax.xlane.f32.xlu0 %v1086
    %v1090 = vpop.xlane.xlu0 %1089
    %v1091 = vsub.f32 %v1086, %v1090
    %v1092 = vmul.f32 %v1091, 1.442695
    %v1093 = vpow.pop %v1092
    %1094 = vadd.xlane.f32.xlu0 %v1093
    %v1095 = vpop.xlane.xlu0 %1094
    %v1096 = vlog2.pop %v1095
    %v1097 = vmul.f32 %v1096, 0.6931472
    %v1098 = vsub.f32 %v1091, %v1097
    %s1099 = scalar_lea.vmem [#allocation10], 40
    %1100 = vst [vmem:[%s1099] sm:$0xff] %v1098
    %s1101 = scalar_lea.vmem [#allocation2], 96
    %v1102 = vld [vmem:[%s1101] sm:$0xff]
    %v1103 = vld [vmem:[%s1101 + $0x8] sm:$0xff]
    %1104 = vmatprep.subr.mxu0 %v114
    %1105 = vmatpush1.msra.mxu0 %v113
    %1106 = vmatprep.subr.mxu0 %v112
    %1107 = vmatpush1.msra.mxu0 %v111
    %1108 = vmatprep.subr.mxu0 %v110
    %1109 = vmatpush1.msra.mxu0 %v109
    %1110 = vmatprep.subr.mxu0 %v108
    %1111 = vmatpush1.msra.mxu0 %v107
    %1112 = vmatprep.subr.mxu0 %v106
    %1113 = vmatpush1.msra.mxu0 %v105
    %1114 = vmatprep.subr.mxu0 %v104
    %1115 = vmatpush1.msra.mxu0 %v103
    %1116 = vmatprep.subr.mxu0 %v102
    %1117 = vmatpush1.msra.mxu0 %v101
    %1118 = vmatprep.subr.mxu0 %v100
    %1119 = vmatpush1.msra.mxu0 %v99
    %1120 = vmatprep.subr.mxu0 %v98
    %1121 = vmatpush1.msra.mxu0 %v97
    %1122 = vmatprep.subr.mxu0 %v96
    %1123 = vmatpush1.msra.mxu0 %v95
    %1124 = vmatprep.subr.mxu0 %v94
    %1125 = vmatpush1.msra.mxu0 %v93
    %1126 = vmatprep.subr.mxu0 %v92
    %1127 = vmatpush1.msra.mxu0 %v91
    %1128 = vmatprep.subr.mxu0 %v90
    %1129 = vmatpush1.msra.mxu0 %v89
    %1130 = vmatprep.subr.mxu0 %v88
    %1131 = vmatpush1.msra.mxu0 %v87
    %1132 = vmatprep.subr.mxu0 %v86
    %1133 = vmatpush1.msra.mxu0 %v85
    %1134 = vmatprep.subr.mxu0 %v84
    %1135 = vmatpush1.msra.mxu0 %v83
    %1136 = vmatprep.subr.mxu0 0.0
    %1137 = vmatpush2.msra.mxu0 0.0
    %1138 = vmatprep.subr.mxu0 0.0
    %1139 = vmatpush2.msra.mxu0 0.0
    %1140 = vmatprep.subr.mxu0 0.0
    %1141 = vmatpush2.msra.mxu0 0.0
    %1142 = vmatprep.subr.mxu0 0.0
    %1143 = vmatpush2.msra.mxu0 0.0
    %1144 = vmatprep.subr.mxu0 0.0
    %1145 = vmatpush2.msra.mxu0 0.0
    %1146 = vmatprep.subr.mxu0 0.0
    %1147 = vmatpush2.msra.mxu0 0.0
    %1148 = vmatprep.subr.mxu0 0.0
    %1149 = vmatpush2.msra.mxu0 0.0
    %1150 = vmatprep.subr.mxu0 0.0
    %1151 = vmatpush2.msra.mxu0 0.0
    %1152 = vmatprep.subr.mxu0 0.0
    %1153 = vmatpush2.msra.mxu0 0.0
    %1154 = vmatprep.subr.mxu0 0.0
    %1155 = vmatpush2.msra.mxu0 0.0
    %1156 = vmatprep.subr.mxu0 0.0
    %1157 = vmatpush2.msra.mxu0 0.0
    %1158 = vmatprep.subr.mxu0 0.0
    %1159 = vmatpush2.msra.mxu0 0.0
    %1160 = vmatprep.subr.mxu0 0.0
    %1161 = vmatpush2.msra.mxu0 0.0
    %1162 = vmatprep.subr.mxu0 0.0
    %1163 = vmatpush2.msra.mxu0 0.0
    %1164 = vmatprep.subr.mxu0 0.0
    %1165 = vmatpush2.msra.mxu0 0.0
    %1166 = vmatprep.subr.mxu0 0.0
    %1167 = vmatpush2.msra.mxu0 0.0
    %1168 = vmatprep.mubr.f32.mxu0 0.0
    %1169 = vmatmul.mubr.f32.gmra.mxu0 %v1017
    %v1170 = vpop.f32.mrf.mxu0
    %v1171 = vadd.f32 0.0, %v1170
    %v1172 = vpop.f32.mrf.mxu0
    %v1173 = vadd.f32 0.0, %v1172
    %1174 = vdwg.mxu0
    %v1175 = vadd.f32 %v1102, %v1171
    %v1176 = vadd.f32 %v1103, %v1173
    %1177 = vmatprep.subr.mxu0 0.0
    %1178 = vmatpush1.msra.mxu0 %v130
    %1179 = vmatprep.subr.mxu0 0.0
    %1180 = vmatpush1.msra.mxu0 %v129
    %1181 = vmatprep.subr.mxu0 0.0
    %1182 = vmatpush1.msra.mxu0 %v128
    %1183 = vmatprep.subr.mxu0 0.0
    %1184 = vmatpush1.msra.mxu0 %v127
    %1185 = vmatprep.subr.mxu0 0.0
    %1186 = vmatpush1.msra.mxu0 %v126
    %1187 = vmatprep.subr.mxu0 0.0
    %1188 = vmatpush1.msra.mxu0 %v125
    %1189 = vmatprep.subr.mxu0 0.0
    %1190 = vmatpush1.msra.mxu0 %v124
    %1191 = vmatprep.subr.mxu0 0.0
    %1192 = vmatpush1.msra.mxu0 %v123
    %1193 = vmatprep.subr.mxu0 0.0
    %1194 = vmatpush1.msra.mxu0 %v122
    %1195 = vmatprep.subr.mxu0 0.0
    %1196 = vmatpush1.msra.mxu0 %v121
    %1197 = vmatprep.subr.mxu0 0.0
    %1198 = vmatpush1.msra.mxu0 %v120
    %1199 = vmatprep.subr.mxu0 0.0
    %1200 = vmatpush1.msra.mxu0 %v119
    %1201 = vmatprep.subr.mxu0 0.0
    %1202 = vmatpush1.msra.mxu0 %v118
    %1203 = vmatprep.subr.mxu0 0.0
    %1204 = vmatpush1.msra.mxu0 %v117
    %1205 = vmatprep.subr.mxu0 0.0
    %1206 = vmatpush1.msra.mxu0 %v116
    %1207 = vmatprep.subr.mxu0 0.0
    %1208 = vmatpush1.msra.mxu0 %v115
    %1209 = vmatprep.subr.mxu0 0.0
    %1210 = vmatpush2.msra.mxu0 %v146
    %1211 = vmatprep.subr.mxu0 0.0
    %1212 = vmatpush2.msra.mxu0 %v145
    %1213 = vmatprep.subr.mxu0 0.0
    %1214 = vmatpush2.msra.mxu0 %v144
    %1215 = vmatprep.subr.mxu0 0.0
    %1216 = vmatpush2.msra.mxu0 %v143
    %1217 = vmatprep.subr.mxu0 0.0
    %1218 = vmatpush2.msra.mxu0 %v142
    %1219 = vmatprep.subr.mxu0 0.0
    %1220 = vmatpush2.msra.mxu0 %v141
    %1221 = vmatprep.subr.mxu0 0.0
    %1222 = vmatpush2.msra.mxu0 %v140
    %1223 = vmatprep.subr.mxu0 0.0
    %1224 = vmatpush2.msra.mxu0 %v139
    %1225 = vmatprep.subr.mxu0 0.0
    %1226 = vmatpush2.msra.mxu0 %v138
    %1227 = vmatprep.subr.mxu0 0.0
    %1228 = vmatpush2.msra.mxu0 %v137
    %1229 = vmatprep.subr.mxu0 0.0
    %1230 = vmatpush2.msra.mxu0 %v136
    %1231 = vmatprep.subr.mxu0 0.0
    %1232 = vmatpush2.msra.mxu0 %v135
    %1233 = vmatprep.subr.mxu0 0.0
    %1234 = vmatpush2.msra.mxu0 %v134
    %1235 = vmatprep.subr.mxu0 0.0
    %1236 = vmatpush2.msra.mxu0 %v133
    %1237 = vmatprep.subr.mxu0 0.0
    %1238 = vmatpush2.msra.mxu0 %v132
    %1239 = vmatprep.subr.mxu0 0.0
    %1240 = vmatpush2.msra.mxu0 %v131
    %1241 = vmatprep.mubr.f32.mxu0 %v1176
    %1242 = vmatmul.mubr.f32.gmra.mxu0 %v1175
    %v1243 = vpop.f32.mrf.mxu0
    %v1244 = vadd.f32 %v152, %v1243
    %v1245 = vpop.f32.mrf.mxu0
    %1246 = vdwg.mxu0
    %1247 = vmax.xlane.f32.xlu0 %v1244
    %v1248 = vpop.xlane.xlu0 %1247
    %v1249 = vsub.f32 %v1244, %v1248
    %v1250 = vmul.f32 %v1249, 1.442695
    %v1251 = vpow.pop %v1250
    %1252 = vadd.xlane.f32.xlu0 %v1251
    %v1253 = vpop.xlane.xlu0 %1252
    %v1254 = vlog2.pop %v1253
    %v1255 = vmul.f32 %v1254, 0.6931472
    %v1256 = vsub.f32 %v1249, %v1255
    %s1257 = scalar_lea.vmem [#allocation10], 48
    %1258 = vst [vmem:[%s1257] sm:$0xff] %v1256
    %s1259 = scalar_lea.vmem [#allocation2], 112
    %v1260 = vld [vmem:[%s1259] sm:$0xff]
    %v1261 = vld [vmem:[%s1259 + $0x8] sm:$0xff]
    %1262 = vmatprep.subr.mxu0 %v114
    %1263 = vmatpush1.msra.mxu0 %v113
    %1264 = vmatprep.subr.mxu0 %v112
    %1265 = vmatpush1.msra.mxu0 %v111
    %1266 = vmatprep.subr.mxu0 %v110
    %1267 = vmatpush1.msra.mxu0 %v109
    %1268 = vmatprep.subr.mxu0 %v108
    %1269 = vmatpush1.msra.mxu0 %v107
    %1270 = vmatprep.subr.mxu0 %v106
    %1271 = vmatpush1.msra.mxu0 %v105
    %1272 = vmatprep.subr.mxu0 %v104
    %1273 = vmatpush1.msra.mxu0 %v103
    %1274 = vmatprep.subr.mxu0 %v102
    %1275 = vmatpush1.msra.mxu0 %v101
    %1276 = vmatprep.subr.mxu0 %v100
    %1277 = vmatpush1.msra.mxu0 %v99
    %1278 = vmatprep.subr.mxu0 %v98
    %1279 = vmatpush1.msra.mxu0 %v97
    %1280 = vmatprep.subr.mxu0 %v96
    %1281 = vmatpush1.msra.mxu0 %v95
    %1282 = vmatprep.subr.mxu0 %v94
    %1283 = vmatpush1.msra.mxu0 %v93
    %1284 = vmatprep.subr.mxu0 %v92
    %1285 = vmatpush1.msra.mxu0 %v91
    %1286 = vmatprep.subr.mxu0 %v90
    %1287 = vmatpush1.msra.mxu0 %v89
    %1288 = vmatprep.subr.mxu0 %v88
    %1289 = vmatpush1.msra.mxu0 %v87
    %1290 = vmatprep.subr.mxu0 %v86
    %1291 = vmatpush1.msra.mxu0 %v85
    %1292 = vmatprep.subr.mxu0 %v84
    %1293 = vmatpush1.msra.mxu0 %v83
    %1294 = vmatprep.subr.mxu0 0.0
    %1295 = vmatpush2.msra.mxu0 0.0
    %1296 = vmatprep.subr.mxu0 0.0
    %1297 = vmatpush2.msra.mxu0 0.0
    %1298 = vmatprep.subr.mxu0 0.0
    %1299 = vmatpush2.msra.mxu0 0.0
    %1300 = vmatprep.subr.mxu0 0.0
    %1301 = vmatpush2.msra.mxu0 0.0
    %1302 = vmatprep.subr.mxu0 0.0
    %1303 = vmatpush2.msra.mxu0 0.0
    %1304 = vmatprep.subr.mxu0 0.0
    %1305 = vmatpush2.msra.mxu0 0.0
    %1306 = vmatprep.subr.mxu0 0.0
    %1307 = vmatpush2.msra.mxu0 0.0
    %1308 = vmatprep.subr.mxu0 0.0
    %1309 = vmatpush2.msra.mxu0 0.0
    %1310 = vmatprep.subr.mxu0 0.0
    %1311 = vmatpush2.msra.mxu0 0.0
    %1312 = vmatprep.subr.mxu0 0.0
    %1313 = vmatpush2.msra.mxu0 0.0
    %1314 = vmatprep.subr.mxu0 0.0
    %1315 = vmatpush2.msra.mxu0 0.0
    %1316 = vmatprep.subr.mxu0 0.0
    %1317 = vmatpush2.msra.mxu0 0.0
    %1318 = vmatprep.subr.mxu0 0.0
    %1319 = vmatpush2.msra.mxu0 0.0
    %1320 = vmatprep.subr.mxu0 0.0
    %1321 = vmatpush2.msra.mxu0 0.0
    %1322 = vmatprep.subr.mxu0 0.0
    %1323 = vmatpush2.msra.mxu0 0.0
    %1324 = vmatprep.subr.mxu0 0.0
    %1325 = vmatpush2.msra.mxu0 0.0
    %1326 = vmatprep.mubr.f32.mxu0 0.0
    %1327 = vmatmul.mubr.f32.gmra.mxu0 %v1175
    %v1328 = vpop.f32.mrf.mxu0
    %v1329 = vadd.f32 0.0, %v1328
    %v1330 = vpop.f32.mrf.mxu0
    %v1331 = vadd.f32 0.0, %v1330
    %1332 = vdwg.mxu0
    %v1333 = vadd.f32 %v1260, %v1329
    %v1334 = vadd.f32 %v1261, %v1331
    %1335 = vmatprep.subr.mxu0 0.0
    %1336 = vmatpush1.msra.mxu0 %v130
    %1337 = vmatprep.subr.mxu0 0.0
    %1338 = vmatpush1.msra.mxu0 %v129
    %1339 = vmatprep.subr.mxu0 0.0
    %1340 = vmatpush1.msra.mxu0 %v128
    %1341 = vmatprep.subr.mxu0 0.0
    %1342 = vmatpush1.msra.mxu0 %v127
    %1343 = vmatprep.subr.mxu0 0.0
    %1344 = vmatpush1.msra.mxu0 %v126
    %1345 = vmatprep.subr.mxu0 0.0
    %1346 = vmatpush1.msra.mxu0 %v125
    %1347 = vmatprep.subr.mxu0 0.0
    %1348 = vmatpush1.msra.mxu0 %v124
    %1349 = vmatprep.subr.mxu0 0.0
    %1350 = vmatpush1.msra.mxu0 %v123
    %1351 = vmatprep.subr.mxu0 0.0
    %1352 = vmatpush1.msra.mxu0 %v122
    %1353 = vmatprep.subr.mxu0 0.0
    %1354 = vmatpush1.msra.mxu0 %v121
    %1355 = vmatprep.subr.mxu0 0.0
    %1356 = vmatpush1.msra.mxu0 %v120
    %1357 = vmatprep.subr.mxu0 0.0
    %1358 = vmatpush1.msra.mxu0 %v119
    %1359 = vmatprep.subr.mxu0 0.0
    %1360 = vmatpush1.msra.mxu0 %v118
    %1361 = vmatprep.subr.mxu0 0.0
    %1362 = vmatpush1.msra.mxu0 %v117
    %1363 = vmatprep.subr.mxu0 0.0
    %1364 = vmatpush1.msra.mxu0 %v116
    %1365 = vmatprep.subr.mxu0 0.0
    %1366 = vmatpush1.msra.mxu0 %v115
    %1367 = vmatprep.subr.mxu0 0.0
    %1368 = vmatpush2.msra.mxu0 %v146
    %1369 = vmatprep.subr.mxu0 0.0
    %1370 = vmatpush2.msra.mxu0 %v145
    %1371 = vmatprep.subr.mxu0 0.0
    %1372 = vmatpush2.msra.mxu0 %v144
    %1373 = vmatprep.subr.mxu0 0.0
    %1374 = vmatpush2.msra.mxu0 %v143
    %1375 = vmatprep.subr.mxu0 0.0
    %1376 = vmatpush2.msra.mxu0 %v142
    %1377 = vmatprep.subr.mxu0 0.0
    %1378 = vmatpush2.msra.mxu0 %v141
    %1379 = vmatprep.subr.mxu0 0.0
    %1380 = vmatpush2.msra.mxu0 %v140
    %1381 = vmatprep.subr.mxu0 0.0
    %1382 = vmatpush2.msra.mxu0 %v139
    %1383 = vmatprep.subr.mxu0 0.0
    %1384 = vmatpush2.msra.mxu0 %v138
    %1385 = vmatprep.subr.mxu0 0.0
    %1386 = vmatpush2.msra.mxu0 %v137
    %1387 = vmatprep.subr.mxu0 0.0
    %1388 = vmatpush2.msra.mxu0 %v136
    %1389 = vmatprep.subr.mxu0 0.0
    %1390 = vmatpush2.msra.mxu0 %v135
    %1391 = vmatprep.subr.mxu0 0.0
    %1392 = vmatpush2.msra.mxu0 %v134
    %1393 = vmatprep.subr.mxu0 0.0
    %1394 = vmatpush2.msra.mxu0 %v133
    %1395 = vmatprep.subr.mxu0 0.0
    %1396 = vmatpush2.msra.mxu0 %v132
    %1397 = vmatprep.subr.mxu0 0.0
    %1398 = vmatpush2.msra.mxu0 %v131
    %1399 = vmatprep.mubr.f32.mxu0 %v1334
    %1400 = vmatmul.mubr.f32.gmra.mxu0 %v1333
    %v1401 = vpop.f32.mrf.mxu0
    %v1402 = vadd.f32 %v152, %v1401
    %v1403 = vpop.f32.mrf.mxu0
    %1404 = vdwg.mxu0
    %1405 = vmax.xlane.f32.xlu0 %v1402
    %v1406 = vpop.xlane.xlu0 %1405
    %v1407 = vsub.f32 %v1402, %v1406
    %v1408 = vmul.f32 %v1407, 1.442695
    %v1409 = vpow.pop %v1408
    %1410 = vadd.xlane.f32.xlu0 %v1409
    %v1411 = vpop.xlane.xlu0 %1410
    %v1412 = vlog2.pop %v1411
    %v1413 = vmul.f32 %v1412, 0.6931472
    %v1414 = vsub.f32 %v1407, %v1413
    %s1415 = scalar_lea.vmem [#allocation10], 56
    %1416 = vst [vmem:[%s1415] sm:$0xff] %v1414
    %1417 = vst [vmem:[#allocation11] sm:$0xff] %v1333
    // Predicated region
    $region42: #{tpu_custom_call.1} parent=1 // pred_check
      _
    $region43: #{tpu_custom_call.1} parent=1 // pred_check_branch
      %1419 = sbr.rel (0) target = $region45
    $region44: #{tpu_custom_call.1} parent=1 // pred_region
      %s1421 = ssub.s32 1024, 1024
      %1422 = vsyncadd [#allocation4], %s1421
      %s1423 = sshll.u32 [#allocation10], 4
      %s1424 = int_to_ptr.vmem [resolvable:$true] %s1423
      %1429 = dma.vmem_to_hbm [thread:$0]  %s1424, 1024, %s5, [#allocation4], 128, 128, 8
    $region45: #{tpu_custom_call.1} parent=1 // pred_fallthru
      _
    // Predicated region
    $region46: #{tpu_custom_call.1} parent=1 // pred_check
      _
    $region47: #{tpu_custom_call.1} parent=1 // pred_check_branch
      %1431 = sbr.rel (0) target = $region49
    $region48: #{tpu_custom_call.1} parent=1 // pred_region
      %s1433 = ssub.s32 128, 128
      %1434 = vsyncadd [#allocation12], %s1433
      %s1436 = sshll.u32 [#allocation11], 4
      %s1437 = int_to_ptr.vmem [resolvable:$true] %s1436
      %1439 = dma.vmem_to_hbm [thread:$0]  %s1437, 128, %s6, [#allocation12]
    $region49: #{tpu_custom_call.1} parent=1 // pred_fallthru
      _
    // Predicated region
    $region50: #{tpu_custom_call.1} parent=1 // pred_check
      _
    $region51: #{tpu_custom_call.1} parent=1 // pred_check_branch
      %1441 = sbr.rel (0) target = $region53
    $region52: #{tpu_custom_call.1} parent=1 // pred_region
      %1442 = dma.done [#allocation4], 1024
    $region53: #{tpu_custom_call.1} parent=1 // pred_fallthru
      _
    // Predicated region
    $region54: #{tpu_custom_call.1} parent=1 // pred_check
      _
    $region55: #{tpu_custom_call.1} parent=1 // pred_check_branch
      %1444 = sbr.rel (0) target = $region57
    $region56: #{tpu_custom_call.1} parent=1 // pred_region
      %1445 = dma.done [#allocation12], 128
    $region57: #{tpu_custom_call.1} parent=1 // pred_fallthru
      _
    %1446 = vsyncpa [#allocation3], 1
    %1447 = vsyncpa [#allocation6], 1
    %1448 = vsyncpa [#allocation9], 1
    %1449 = vsyncpa [#allocation4], 1
    %1450 = vsyncpa [#allocation12], 1

</llo_original>
